<compile_context>
chip_gen: v5e
topology: v5e:2x2
jax: 0.10.0
libtpu: 0.0.40
codegen_flags: <defaults>
</compile_context>

<pallas_src>
import functools

import jax
import jax.numpy as jnp
from jax.experimental import pallas as pl
from jax.experimental.pallas import tpu as pltpu

NUM_DISEASE = 7          # placeholder for the project constant NUM_DISEASE
NUM_GROW = 5             # placeholder for the project constant NUM_GROW
BN_EPS = 1e-3            # EfficientNet batch_norm_epsilon
SE_RATIO = 0.25
STEM_CH = 32
HEAD_CH = 1280           # in_feat of backbone._fc for efficientnet-b0

MATMUL_TILE_M = 512                 # row tile for 1x1-conv / im2col matmuls
DW_PATCH_BUDGET = 4 * 1024 * 1024   # target bytes for one depthwise patch tile
VMEM_LIMIT = 40 * 1024 * 1024       # explicit scoped-VMEM limit (safe on v5e/v6e/v7x)

# EfficientNet-b0 block args: (repeats, kernel, stride, expand, in_ch, out_ch)
_B0_STAGES = [
    (1, 3, 1, 1, 32, 16),
    (2, 3, 2, 6, 16, 24),
    (2, 5, 2, 6, 24, 40),
    (3, 3, 2, 6, 40, 80),
    (3, 5, 1, 6, 80, 112),
    (4, 5, 2, 6, 112, 192),
    (1, 3, 1, 6, 192, 320),
]


def _vmem():
    return pl.BlockSpec(memory_space=pltpu.MemorySpace.VMEM)


# --------------------------------------------------------------------------
# Kernel 1: fused matmul + per-channel scale/bias (folded BN) + activation
#   (stem conv via im2col, 1x1 expand convs, 1x1 head conv)
# --------------------------------------------------------------------------
def _matmul_scale_bias_act_kernel(x_ref, w_ref, s_ref, b_ref, o_ref, *, act):
    x = x_ref[...].astype(jnp.bfloat16)            # bf16 MXU inputs, f32 acc
    acc = jnp.dot(x, w_ref[...], preferred_element_type=jnp.float32)
    acc = acc * s_ref[...] + b_ref[...]
    if act == "swish":
        acc = acc * jax.nn.sigmoid(acc)
    elif act == "sigmoid":
        acc = jax.nn.sigmoid(acc)
    o_ref[...] = acc


def matmul_scale_bias_act(x, w, scale, bias, act="none"):
    m, k = x.shape
    _, n = w.shape
    tm = m if m <= MATMUL_TILE_M else MATMUL_TILE_M
    grid = (pl.cdiv(m, tm),)
    return pl.pallas_call(
        functools.partial(_matmul_scale_bias_act_kernel, act=act),
        out_shape=jax.ShapeDtypeStruct((m, n), jnp.float32),
        grid=grid,
        in_specs=[
            pl.BlockSpec((tm, k), lambda i: (i, 0)),
            pl.BlockSpec((k, n), lambda i: (0, 0)),      # weight stays resident
            pl.BlockSpec((1, n), lambda i: (0, 0)),
            pl.BlockSpec((1, n), lambda i: (0, 0)),
        ],
        out_specs=pl.BlockSpec((tm, n), lambda i: (i, 0)),
        compiler_params=pltpu.CompilerParams(
            dimension_semantics=("parallel",),
            vmem_limit_bytes=VMEM_LIMIT),
    )(x, w, scale.reshape(1, n), bias.reshape(1, n))


# --------------------------------------------------------------------------
# Kernel 2: depthwise conv (tap-MAC over tap-major patches) + BN + swish,
#           with the SE squeeze (global average) fused as an accumulator.
# --------------------------------------------------------------------------
def _dwconv_kernel(p_ref, w_ref, s_ref, b_ref, o_ref, sq_ref,
                   *, k2, rows, tile, inv_hw):
    j = pl.program_id(1)
    w = w_ref[...]                                  # (k2, C)
    acc = p_ref[0, 0] * w[0]                        # each tap: contiguous (tile, C)
    for t in range(1, k2):
        acc = acc + p_ref[0, t] * w[t]
    acc = acc * s_ref[...] + b_ref[...]
    y = acc * jax.nn.sigmoid(acc)
    o_ref[0] = y

    # SE squeeze: accumulate per-batch channel means across the hw grid axis.
    @pl.when(j == 0)
    def _():
        sq_ref[...] = jnp.zeros_like(sq_ref)

    if rows % tile == 0:
        ym = y
    else:  # mask rows of the padded boundary block out of the reduction
        row_ids = jax.lax.broadcasted_iota(jnp.int32, (tile, 1), 0) + j * tile
        ym = jnp.where(row_ids < rows, y, 0.0)
    sq_ref[0] = sq_ref[0] + jnp.sum(ym, axis=0, keepdims=True) * inv_hw


def _dw_tile(rows, bytes_per_row):
    t = (DW_PATCH_BUDGET // bytes_per_row) // 8 * 8
    t = max(8, min(512, t))
    return rows if rows <= t else t


def dwconv_bn_swish_squeeze(patches, w, scale, bias):
    # patches: (N, k*k, HW, C) tap-major; returns feat (N, HW, C), mean (N, C)
    n, k2, rows, c = patches.shape
    tile = _dw_tile(rows, k2 * c * 4)
    grid = (n, pl.cdiv(rows, tile))
    feat, sq = pl.pallas_call(
        functools.partial(_dwconv_kernel, k2=k2, rows=rows, tile=tile,
                          inv_hw=1.0 / rows),
        out_shape=(jax.ShapeDtypeStruct((n, rows, c), jnp.float32),
                   jax.ShapeDtypeStruct((n, 1, c), jnp.float32)),
        grid=grid,
        in_specs=[
            pl.BlockSpec((1, k2, tile, c), lambda i, j: (i, 0, j, 0)),
            pl.BlockSpec((k2, c), lambda i, j: (0, 0)),
            pl.BlockSpec((1, c), lambda i, j: (0, 0)),
            pl.BlockSpec((1, c), lambda i, j: (0, 0)),
        ],
        out_specs=(pl.BlockSpec((1, tile, c), lambda i, j: (i, j, 0)),
                   pl.BlockSpec((1, 1, c), lambda i, j: (i, 0, 0))),
        compiler_params=pltpu.CompilerParams(
            dimension_semantics=("parallel", "arbitrary"),
            vmem_limit_bytes=VMEM_LIMIT),
    )(patches, w, scale.reshape(1, c), bias.reshape(1, c))
    return feat, sq.reshape(n, c)


# --------------------------------------------------------------------------
# Kernel 3: fused SE reduce (swish) + expand (sigmoid) -> per-channel gate
# --------------------------------------------------------------------------
def _se_gate_kernel(sq_ref, wr_ref, br_ref, we_ref, be_ref, g_ref):
    z = jnp.dot(sq_ref[...].astype(jnp.bfloat16), wr_ref[...],
                preferred_element_type=jnp.float32) + br_ref[...]
    z = z * jax.nn.sigmoid(z)
    g = jnp.dot(z.astype(jnp.bfloat16), we_ref[...],
                preferred_element_type=jnp.float32) + be_ref[...]
    g_ref[...] = jax.nn.sigmoid(g)


def se_gates(squeezed, wr, br, we, be):
    n, cexp = squeezed.shape
    nsq = wr.shape[1]
    return pl.pallas_call(
        _se_gate_kernel,
        out_shape=jax.ShapeDtypeStruct((n, cexp), jnp.float32),
        in_specs=[_vmem() for _ in range(5)],
        out_specs=_vmem(),
    )(squeezed, wr, br.reshape(1, nsq), we, be.reshape(1, cexp))


# --------------------------------------------------------------------------
# Kernel 4: projection 1x1 conv + BN, with SE-gate multiply folded into the
#           matmul LHS and the identity-skip residual added in-kernel.
# --------------------------------------------------------------------------
def _project_kernel(x_ref, g_ref, w_ref, s_ref, b_ref, *rest):
    if len(rest) == 2:
        res_ref, o_ref = rest
    else:
        res_ref = None
        (o_ref,) = rest
    xg = (x_ref[0] * g_ref[0]).astype(jnp.bfloat16)     # gate commutes into LHS
    acc = jnp.dot(xg, w_ref[...], preferred_element_type=jnp.float32)
    acc = acc * s_ref[...] + b_ref[...]
    if res_ref is not None:
        acc = acc + res_ref[0]
    o_ref[0] = acc


def project_gate_residual(feat, gate, w, scale, bias, residual=None):
    n, hw, cexp = feat.shape
    cout = w.shape[1]
    tile = hw if hw <= MATMUL_TILE_M else MATMUL_TILE_M
    grid = (n, pl.cdiv(hw, tile))
    in_specs = [
        pl.BlockSpec((1, tile, cexp), lambda i, j: (i, j, 0)),
        pl.BlockSpec((1, 1, cexp), lambda i, j: (i, 0, 0)),
        pl.BlockSpec((cexp, cout), lambda i, j: (0, 0)),
        pl.BlockSpec((1, cout), lambda i, j: (0, 0)),
        pl.BlockSpec((1, cout), lambda i, j: (0, 0)),
    ]
    args = [feat, gate.reshape(n, 1, cexp), w,
            scale.reshape(1, cout), bias.reshape(1, cout)]
    if residual is not None:
        in_specs.append(pl.BlockSpec((1, tile, cout), lambda i, j: (i, j, 0)))
        args.append(residual)
    return pl.pallas_call(
        _project_kernel,
        out_shape=jax.ShapeDtypeStruct((n, hw, cout), jnp.float32),
        grid=grid,
        in_specs=in_specs,
        out_specs=pl.BlockSpec((1, tile, cout), lambda i, j: (i, j, 0)),
        compiler_params=pltpu.CompilerParams(
            dimension_semantics=("parallel", "parallel"),
            vmem_limit_bytes=VMEM_LIMIT),
    )(*args)


# --------------------------------------------------------------------------
# Kernel 5: adaptive avg-pool + flatten + both linear heads (single matmul on
#           the concatenated head weights).
# --------------------------------------------------------------------------
def _pool_heads_kernel(x_ref, w_ref, b_ref, o_ref):
    pooled = jnp.mean(x_ref[0], axis=0, keepdims=True)         # (1, C)
    o_ref[0] = jnp.dot(pooled.astype(jnp.bfloat16), w_ref[...],
                       preferred_element_type=jnp.float32) + b_ref[...]


def pool_and_heads(feats, w, b):
    n, hw, c = feats.shape
    nout = w.shape[1]
    out = pl.pallas_call(
        _pool_heads_kernel,
        out_shape=jax.ShapeDtypeStruct((n, 1, nout), jnp.float32),
        grid=(n,),
        in_specs=[pl.BlockSpec((1, hw, c), lambda i: (i, 0, 0)),
                  pl.BlockSpec((c, nout), lambda i: (0, 0)),
                  pl.BlockSpec((1, nout), lambda i: (0, 0))],
        out_specs=pl.BlockSpec((1, 1, nout), lambda i: (i, 0, 0)),
        compiler_params=pltpu.CompilerParams(
            dimension_semantics=("parallel",),
            vmem_limit_bytes=VMEM_LIMIT),
    )(feats, w, b.reshape(1, nout))
    return out.reshape(n, nout)


# --------------------------------------------------------------------------
# Plain-JAX glue: TF-style SAME padding + patch extraction (indexing only)
# --------------------------------------------------------------------------
def _tf_same_pad(x, k, s):
    _, h, w, _ = x.shape
    oh, ow = -(-h // s), -(-w // s)
    ph = max((oh - 1) * s + k - h, 0)
    pw = max((ow - 1) * s + k - w, 0)
    xp = jnp.pad(x, ((0, 0), (ph // 2, ph - ph // 2),
                     (pw // 2, pw - pw // 2), (0, 0)))
    return xp, oh, ow


def _extract_patches_dw(x, k, s):
    """(N,H,W,C) -> ((N, k*k, oh*ow, C), oh, ow); tap-major for the dw kernel."""
    xp, oh, ow = _tf_same_pad(x, k, s)
    n, _, _, c = x.shape
    taps = []
    for di in range(k):
        for dj in range(k):
            taps.append(xp[:, di:di + s * oh:s, dj:dj + s * ow:s, :])
    p = jnp.stack(taps, axis=1)                       # (N, k*k, oh, ow, C)
    return p.reshape(n, k * k, oh * ow, c), oh, ow


def _extract_patches_stem(x, k, s):
    """(N,H,W,C) -> ((N*oh*ow, k*k*C), oh, ow); im2col rows for the stem matmul."""
    xp, oh, ow = _tf_same_pad(x, k, s)
    n, _, _, c = x.shape
    taps = []
    for di in range(k):
        for dj in range(k):
            taps.append(xp[:, di:di + s * oh:s, dj:dj + s * ow:s, :])
    p = jnp.stack(taps, axis=3)                       # (N, oh, ow, k*k, C)
    return p.reshape(n * oh * ow, k * k * c), oh, ow


# --------------------------------------------------------------------------
# Deterministic parameter initialisation (b0 shapes, BN folded to scale/bias)
# --------------------------------------------------------------------------
class _ParamRng:
    def __init__(self, seed):
        self._key = jax.random.PRNGKey(seed)
        self._ctr = 0

    def next(self):
        self._ctr += 1
        return jax.random.fold_in(self._key, self._ctr)


def _init_w(rng, shape, fan_in, dtype=jnp.float32):
    w = jax.random.normal(rng.next(), shape, jnp.float32)
    return (w / jnp.sqrt(float(fan_in))).astype(dtype)


def _init_bn(rng, c):
    gamma = 1.0 + 0.05 * jax.random.normal(rng.next(), (c,), jnp.float32)
    beta = 0.05 * jax.random.normal(rng.next(), (c,), jnp.float32)
    mean = 0.05 * jax.random.normal(rng.next(), (c,), jnp.float32)
    var = 1.0 + 0.05 * jax.random.uniform(rng.next(), (c,), jnp.float32)
    scale = gamma / jnp.sqrt(var + BN_EPS)
    bias = beta - mean * scale
    return scale.astype(jnp.float32), bias.astype(jnp.float32)


def _expand_block_args():
    blocks = []
    for reps, k, s, e, cin, cout in _B0_STAGES:
        blocks.append(dict(k=k, s=s, e=e, cin=cin, cout=cout))
        for _ in range(reps - 1):
            blocks.append(dict(k=k, s=1, e=e, cin=cout, cout=cout))
    return blocks


def init_params(seed=42, in_ch=3):
    rng = _ParamRng(seed)
    params = {
        "stem_w": _init_w(rng, (3 * 3 * in_ch, STEM_CH), 3 * 3 * in_ch,
                          jnp.bfloat16),
        "stem_bn": _init_bn(rng, STEM_CH),
    }
    blocks = []
    for a in _expand_block_args():
        cexp = a["cin"] * a["e"]
        nsq = max(1, int(a["cin"] * SE_RATIO))
        p = {"args": a}
        if a["e"] != 1:
            p["expand_w"] = _init_w(rng, (a["cin"], cexp), a["cin"], jnp.bfloat16)
            p["bn0"] = _init_bn(rng, cexp)
        p["dw_w"] = _init_w(rng, (a["k"] * a["k"], cexp), a["k"] * a["k"])
        p["bn1"] = _init_bn(rng, cexp)
        p["se_r_w"] = _init_w(rng, (cexp, nsq), cexp, jnp.bfloat16)
        p["se_r_b"] = jnp.zeros((nsq,), jnp.float32)
        p["se_e_w"] = _init_w(rng, (nsq, cexp), nsq, jnp.bfloat16)
        p["se_e_b"] = jnp.zeros((cexp,), jnp.float32)
        p["proj_w"] = _init_w(rng, (cexp, a["cout"]), cexp, jnp.bfloat16)
        p["bn2"] = _init_bn(rng, a["cout"])
        blocks.append(p)
    params["blocks"] = blocks
    params["head_w"] = _init_w(rng, (320, HEAD_CH), 320, jnp.bfloat16)
    params["head_bn"] = _init_bn(rng, HEAD_CH)
    params["disease_w"] = _init_w(rng, (HEAD_CH, NUM_DISEASE), HEAD_CH, jnp.bfloat16)
    params["disease_b"] = jnp.zeros((NUM_DISEASE,), jnp.float32)
    params["grow_w"] = _init_w(rng, (HEAD_CH, NUM_GROW), HEAD_CH, jnp.bfloat16)
    params["grow_b"] = jnp.zeros((NUM_GROW,), jnp.float32)
    return params


# --------------------------------------------------------------------------
# Forward pass (inference semantics of MultiTaskEfficientNet.forward)
# --------------------------------------------------------------------------
def mbconv_block(x, p):
    a = p["args"]
    n, h, w, cin = x.shape
    inputs = x
    cexp = cin * a["e"]

    # expansion (1x1 conv + BN + swish)
    if a["e"] != 1:
        s0, b0 = p["bn0"]
        y = matmul_scale_bias_act(x.reshape(n * h * w, cin),
                                  p["expand_w"], s0, b0, act="swish")
        x = y.reshape(n, h, w, cexp)

    # depthwise conv + BN + swish, fused SE squeeze (global average pool)
    patches, oh, ow = _extract_patches_dw(x, a["k"], a["s"])
    s1, b1 = p["bn1"]
    feat, squeezed = dwconv_bn_swish_squeeze(patches, p["dw_w"], s1, b1)

    # squeeze-and-excite gates (fused reduce + expand)
    gate = se_gates(squeezed, p["se_r_w"], p["se_r_b"],
                    p["se_e_w"], p["se_e_b"])

    # projection (1x1 conv + BN) with fused SE-gate multiply and residual add
    s2, b2 = p["bn2"]
    residual = None
    if a["s"] == 1 and a["cin"] == a["cout"]:
        residual = inputs.reshape(n, h * w, a["cout"])
    out = project_gate_residual(feat, gate, p["proj_w"], s2, b2,
                                residual=residual)
    return out.reshape(n, oh, ow, a["cout"])


def multitask_efficientnet_forward(x_nchw, params):
    # PyTorch input is NCHW; kernels use NHWC (channels on TPU lanes).
    x = jnp.transpose(x_nchw, (0, 2, 3, 1)).astype(jnp.float32)
    n = x.shape[0]

    # stem: 3x3 stride-2 conv (im2col matmul) + BN + swish
    patches, oh, ow = _extract_patches_stem(x, 3, 2)
    s, b = params["stem_bn"]
    y = matmul_scale_bias_act(patches, params["stem_w"], s, b, act="swish")
    x = y.reshape(n, oh, ow, STEM_CH)

    # 16 MBConv blocks
    for p in params["blocks"]:
        x = mbconv_block(x, p)

    # head: 1x1 conv -> 1280 + BN + swish
    n_, h_, w_, c_ = x.shape
    s, b = params["head_bn"]
    y = matmul_scale_bias_act(x.reshape(n_ * h_ * w_, c_),
                              params["head_w"], s, b, act="swish")
    feats = y.reshape(n_, h_ * w_, HEAD_CH)

    # adaptive avg-pool + flatten(1) + both linear heads in one fused matmul
    heads_w = jnp.concatenate([params["disease_w"], params["grow_w"]], axis=1)
    heads_b = jnp.concatenate([params["disease_b"], params["grow_b"]], axis=0)
    logits = pool_and_heads(feats, heads_w, heads_b)
    return logits[:, :NUM_DISEASE], logits[:, NUM_DISEASE:]


if __name__ == "__main__":
    params = init_params(seed=42, in_ch=3)
    x = jax.random.normal(jax.random.PRNGKey(0), (2, 3, 32, 32), jnp.float32)
    disease_logits, grow_logits = multitask_efficientnet_forward(x, params)
    jax.block_until_ready((disease_logits, grow_logits))
    assert disease_logits.shape == (2, NUM_DISEASE)
    assert grow_logits.shape == (2, NUM_GROW)
    assert bool(jnp.all(jnp.isfinite(disease_logits)))
    assert bool(jnp.all(jnp.isfinite(grow_logits)))
    print("KERNEL_OK")
</pallas_src>

<mosaic_0001>
module attributes {stable_mosaic.version = 11 : i64} {
  func.func @_matmul_scale_bias_act_kernel(%arg0: i32, %arg1: memref<512x27xf32, #tpu.memory_space<vmem>>, %arg2: memref<27x32xbf16, #tpu.memory_space<vmem>>, %arg3: memref<1x32xf32, #tpu.memory_space<vmem>>, %arg4: memref<1x32xf32, #tpu.memory_space<vmem>>, %arg5: memref<512x32xf32, #tpu.memory_space<vmem>>) attributes {dimension_semantics = [#tpu.dimension_semantics<parallel>], iteration_bounds = array<i64: 1>, scalar_prefetch = 0 : i64, scratch_operands = 0 : i64, tpu.core_type = #tpu.core_type<tc>, window_params = [{transform_indices = @transform_0, window_bounds = array<i64: 512, 27>}, {pipeline_mode = #tpu.pipeline_mode<synchronous>, transform_indices = @transform_1, window_bounds = array<i64: 27, 32>}, {pipeline_mode = #tpu.pipeline_mode<synchronous>, transform_indices = @transform_2, window_bounds = array<i64: 1, 32>}, {pipeline_mode = #tpu.pipeline_mode<synchronous>, transform_indices = @transform_3, window_bounds = array<i64: 1, 32>}, {transform_indices = @transform_4, window_bounds = array<i64: 512, 32>}]} {
    %c0 = arith.constant 0 : index
    %c0_0 = arith.constant 0 : index
    %0 = vector.load %arg1[%c0, %c0_0] : memref<512x27xf32, #tpu.memory_space<vmem>>, vector<512x27xf32>
    %1 = arith.truncf %0 : vector<512x27xf32> to vector<512x27xbf16>
    %c0_1 = arith.constant 0 : index
    %c0_2 = arith.constant 0 : index
    %2 = vector.load %arg2[%c0_1, %c0_2] : memref<27x32xbf16, #tpu.memory_space<vmem>>, vector<27x32xbf16>
    %cst = arith.constant dense<0.000000e+00> : vector<512x32xf32>
    %3 = tpu.matmul %1, %2, %cst {dimension_numbers = #tpu.dot_dimension_numbers<[1], [0], [0], [1], [0, 0, 1, 1], [], []>} : vector<512x27xbf16>, vector<27x32xbf16>, vector<512x32xf32> -> vector<512x32xf32>
    %c0_3 = arith.constant 0 : index
    %c0_4 = arith.constant 0 : index
    %4 = vector.load %arg3[%c0_3, %c0_4] : memref<1x32xf32, #tpu.memory_space<vmem>>, vector<1x32xf32>
    %5 = vector.broadcast %4 : vector<1x32xf32> to vector<512x32xf32>
    %6 = arith.mulf %3, %5 : vector<512x32xf32>
    %c0_5 = arith.constant 0 : index
    %c0_6 = arith.constant 0 : index
    %7 = vector.load %arg4[%c0_5, %c0_6] : memref<1x32xf32, #tpu.memory_space<vmem>>, vector<1x32xf32>
    %8 = vector.broadcast %7 : vector<1x32xf32> to vector<512x32xf32>
    %9 = arith.addf %6, %8 : vector<512x32xf32>
    %10 = arith.negf %9 : vector<512x32xf32>
    %11 = math.exp %10 : vector<512x32xf32>
    %cst_7 = arith.constant 1.000000e+00 : f32
    %12 = vector.broadcast %cst_7 : f32 to vector<512x32xf32>
    %13 = arith.addf %12, %11 : vector<512x32xf32>
    %14 = arith.divf %12, %13 : vector<512x32xf32>
    %15 = arith.mulf %9, %14 : vector<512x32xf32>
    %c0_8 = arith.constant 0 : index
    %c0_9 = arith.constant 0 : index
    %16 = vector.load %arg5[%c0_8, %c0_9] : memref<512x32xf32, #tpu.memory_space<vmem>>, vector<512x32xf32>
    tpu.vector_store %arg5[%c0_8, %c0_9], %15 {strides = array<i32>} : memref<512x32xf32, #tpu.memory_space<vmem>>, vector<512x32xf32>,
    return
  }
  func.func @transform_0(%arg0: i32) -> (i32, i32) {
    %c0_i32 = arith.constant 0 : i32
    %c0_i32_0 = arith.constant 0 : i32
    return %arg0, %c0_i32 : i32, i32
  }
  func.func @transform_1(%arg0: i32) -> (i32, i32) {
    %c0_i32 = arith.constant 0 : i32
    %c0_i32_0 = arith.constant 0 : i32
    %c0_i32_1 = arith.constant 0 : i32
    return %c0_i32, %c0_i32_0 : i32, i32
  }
  func.func @transform_2(%arg0: i32) -> (i32, i32) {
    %c0_i32 = arith.constant 0 : i32
    %c0_i32_0 = arith.constant 0 : i32
    %c0_i32_1 = arith.constant 0 : i32
    return %c0_i32, %c0_i32_0 : i32, i32
  }
  func.func @transform_3(%arg0: i32) -> (i32, i32) {
    %c0_i32 = arith.constant 0 : i32
    %c0_i32_0 = arith.constant 0 : i32
    %c0_i32_1 = arith.constant 0 : i32
    return %c0_i32, %c0_i32_0 : i32, i32
  }
  func.func @transform_4(%arg0: i32) -> (i32, i32) {
    %c0_i32 = arith.constant 0 : i32
    %c0_i32_0 = arith.constant 0 : i32
    return %arg0, %c0_i32 : i32, i32
  }
}

</mosaic_0001>

<llo_original>
// kernel: tpu_custom_call.1
$region0: #{tpu_custom_call.1}
  #allocation0 [shape = 'u32[]', space=smem, size = 0x4, offset = 0x4, fixed_abs, tag = 'smem constant byte address 0x4 - core index']
  #allocation1 [shape = 'u32[72,128]{1,0:T(1,128)}', space=vmem, size = 0x9000, scoped, tag = 'internal scratch']
  %s0 = inlined_call_operand.vmem [shape: f32[512,27], index: 0, kind: input, shape index: {}]
  %s1 = inlined_call_operand.vmem [shape: bf16[27,32], index: 1, kind: input, shape index: {}]
  %s2 = inlined_call_operand.vmem [shape: f32[1,32], index: 2, kind: input, shape index: {}]
  %s3 = inlined_call_operand.vmem [shape: f32[1,32], index: 3, kind: input, shape index: {}]
  %s4 = inlined_call_operand.vmem [shape: f32[512,32], index: 4, kind: output, shape index: {}]
  %s5 = sld [smem:[#allocation0]]
  $region26: #{tpu_custom_call.1} parent=0
    _
  %s7 = ssub.s32 1, %s5
  %s8 = scalar_select 0, %s7, %s5
  // Predicated region
  $region2: #{tpu_custom_call.1} parent=0 // pred_check
    _
  $region3: #{tpu_custom_call.1} parent=0 // pred_check_branch
    %10 = sbr.rel (0) target = $region5
  $region4: #{tpu_custom_call.1} parent=0 // pred_region
    _
  $region5: #{tpu_custom_call.1} parent=0 // pred_fallthru
    _
  // Predicated region
  $region6: #{tpu_custom_call.1} parent=0 // pred_check
    _
  $region7: #{tpu_custom_call.1} parent=0 // pred_check_branch
    %12 = sbr.rel (0) target = $region9
  $region8: #{tpu_custom_call.1} parent=0 // pred_region
    _
  $region9: #{tpu_custom_call.1} parent=0 // pred_fallthru
    _
  // Predicated region
  $region10: #{tpu_custom_call.1} parent=0 // pred_check
    _
  $region11: #{tpu_custom_call.1} parent=0 // pred_check_branch
    %14 = sbr.rel (0) target = $region13
  $region12: #{tpu_custom_call.1} parent=0 // pred_region
    _
  $region13: #{tpu_custom_call.1} parent=0 // pred_fallthru
    _
  // Predicated region
  $region14: #{tpu_custom_call.1} parent=0 // pred_check
    _
  $region15: #{tpu_custom_call.1} parent=0 // pred_check_branch
    %16 = sbr.rel (0) target = $region17
  $region16: #{tpu_custom_call.1} parent=0 // pred_region
    _
  $region17: #{tpu_custom_call.1} parent=0 // pred_fallthru
    _
  %v18 = vld [vmem:[%s0] sm:$0xff]
  %v19 = vld [vmem:[%s0 + $0x8] sm:$0xff]
  %v20 = vld [vmem:[%s0 + $0x10] sm:$0xff]
  %v21 = vld [vmem:[%s0 + $0x18] sm:$0xff]
  %v22 = vld [vmem:[%s0 + $0x20] sm:$0xff]
  %v23 = vld [vmem:[%s0 + $0x28] sm:$0xff]
  %v24 = vld [vmem:[%s0 + $0x30] sm:$0xff]
  %v25 = vld [vmem:[%s0 + $0x38] sm:$0xff]
  %v26 = vld [vmem:[%s0 + $0x40] sm:$0xff]
  %v27 = vld [vmem:[%s0 + $0x48] sm:$0xff]
  %v28 = vld [vmem:[%s0 + $0x50] sm:$0xff]
  %v29 = vld [vmem:[%s0 + $0x58] sm:$0xff]
  %v30 = vld [vmem:[%s0 + $0x60] sm:$0xff]
  %v31 = vld [vmem:[%s0 + $0x68] sm:$0xff]
  %v32 = vld [vmem:[%s0 + $0x70] sm:$0xff]
  %v33 = vld [vmem:[%s0 + $0x78] sm:$0xff]
  %v34 = vld [vmem:[%s0 + $0x80] sm:$0xff]
  %v35 = vld [vmem:[%s0 + $0x88] sm:$0xff]
  %v36 = vld [vmem:[%s0 + $0x90] sm:$0xff]
  %v37 = vld [vmem:[%s0 + $0x98] sm:$0xff]
  %v38 = vld [vmem:[%s0 + $0xa0] sm:$0xff]
  %v39 = vld [vmem:[%s0 + $0xa8] sm:$0xff]
  %v40 = vld [vmem:[%s0 + $0xb0] sm:$0xff]
  %v41 = vld [vmem:[%s0 + $0xb8] sm:$0xff]
  %v42 = vld [vmem:[%s0 + $0xc0] sm:$0xff]
  %v43 = vld [vmem:[%s0 + $0xc8] sm:$0xff]
  %v44 = vld [vmem:[%s0 + $0xd0] sm:$0xff]
  %v45 = vld [vmem:[%s0 + $0xd8] sm:$0xff]
  %v46 = vld [vmem:[%s0 + $0xe0] sm:$0xff]
  %v47 = vld [vmem:[%s0 + $0xe8] sm:$0xff]
  %v48 = vld [vmem:[%s0 + $0xf0] sm:$0xff]
  %v49 = vld [vmem:[%s0 + $0xf8] sm:$0xff]
  %v50 = vld [vmem:[%s0 + $0x100] sm:$0xff]
  %v51 = vld [vmem:[%s0 + $0x108] sm:$0xff]
  %v52 = vld [vmem:[%s0 + $0x110] sm:$0xff]
  %v53 = vld [vmem:[%s0 + $0x118] sm:$0xff]
  %v54 = vld [vmem:[%s0 + $0x120] sm:$0xff]
  %v55 = vld [vmem:[%s0 + $0x128] sm:$0xff]
  %v56 = vld [vmem:[%s0 + $0x130] sm:$0xff]
  %v57 = vld [vmem:[%s0 + $0x138] sm:$0xff]
  %v58 = vld [vmem:[%s0 + $0x140] sm:$0xff]
  %v59 = vld [vmem:[%s0 + $0x148] sm:$0xff]
  %v60 = vld [vmem:[%s0 + $0x150] sm:$0xff]
  %v61 = vld [vmem:[%s0 + $0x158] sm:$0xff]
  %v62 = vld [vmem:[%s0 + $0x160] sm:$0xff]
  %v63 = vld [vmem:[%s0 + $0x168] sm:$0xff]
  %v64 = vld [vmem:[%s0 + $0x170] sm:$0xff]
  %v65 = vld [vmem:[%s0 + $0x178] sm:$0xff]
  %v66 = vld [vmem:[%s0 + $0x180] sm:$0xff]
  %v67 = vld [vmem:[%s0 + $0x188] sm:$0xff]
  %v68 = vld [vmem:[%s0 + $0x190] sm:$0xff]
  %v69 = vld [vmem:[%s0 + $0x198] sm:$0xff]
  %v70 = vld [vmem:[%s0 + $0x1a0] sm:$0xff]
  %v71 = vld [vmem:[%s0 + $0x1a8] sm:$0xff]
  %v72 = vld [vmem:[%s0 + $0x1b0] sm:$0xff]
  %v73 = vld [vmem:[%s0 + $0x1b8] sm:$0xff]
  %v74 = vld [vmem:[%s0 + $0x1c0] sm:$0xff]
  %v75 = vld [vmem:[%s0 + $0x1c8] sm:$0xff]
  %v76 = vld [vmem:[%s0 + $0x1d0] sm:$0xff]
  %v77 = vld [vmem:[%s0 + $0x1d8] sm:$0xff]
  %v78 = vld [vmem:[%s0 + $0x1e0] sm:$0xff]
  %v79 = vld [vmem:[%s0 + $0x1e8] sm:$0xff]
  %v80 = vld [vmem:[%s0 + $0x1f0] sm:$0xff]
  %v81 = vld [vmem:[%s0 + $0x1f8] sm:$0xff]
  %v82 = vpack.c.bf16 %v19, %v18
  %v83 = vpack.c.bf16 %v21, %v20
  %v84 = vpack.c.bf16 %v23, %v22
  %v85 = vpack.c.bf16 %v25, %v24
  %v86 = vpack.c.bf16 %v27, %v26
  %v87 = vpack.c.bf16 %v29, %v28
  %v88 = vpack.c.bf16 %v31, %v30
  %v89 = vpack.c.bf16 %v33, %v32
  %v90 = vpack.c.bf16 %v35, %v34
  %v91 = vpack.c.bf16 %v37, %v36
  %v92 = vpack.c.bf16 %v39, %v38
  %v93 = vpack.c.bf16 %v41, %v40
  %v94 = vpack.c.bf16 %v43, %v42
  %v95 = vpack.c.bf16 %v45, %v44
  %v96 = vpack.c.bf16 %v47, %v46
  %v97 = vpack.c.bf16 %v49, %v48
  %v98 = vpack.c.bf16 %v51, %v50
  %v99 = vpack.c.bf16 %v53, %v52
  %v100 = vpack.c.bf16 %v55, %v54
  %v101 = vpack.c.bf16 %v57, %v56
  %v102 = vpack.c.bf16 %v59, %v58
  %v103 = vpack.c.bf16 %v61, %v60
  %v104 = vpack.c.bf16 %v63, %v62
  %v105 = vpack.c.bf16 %v65, %v64
  %v106 = vpack.c.bf16 %v67, %v66
  %v107 = vpack.c.bf16 %v69, %v68
  %v108 = vpack.c.bf16 %v71, %v70
  %v109 = vpack.c.bf16 %v73, %v72
  %v110 = vpack.c.bf16 %v75, %v74
  %v111 = vpack.c.bf16 %v77, %v76
  %v112 = vpack.c.bf16 %v79, %v78
  %v113 = vpack.c.bf16 %v81, %v80
  %v114 = vld [vmem:[%s1] sm:$0xf]
  %v115 = vld [vmem:[%s1 + $0x4] sm:$0xf]
  %v116 = vld [vmem:[%s1 + $0x8] sm:$0xf]
  %v117 = vld [vmem:[%s1 + $0xc] sm:$0x3]
  %v122 = vunpack.c.l.b16 %v114
  %v123 = vunpack.c.l.b16 %v115
  %v124 = vunpack.c.l.b16 %v116
  %v125 = vunpack.c.l.b16 %v117
  %v126 = vpack.c.b16 %v123, %v122
  %v127 = vpack.c.b16 %v125, %v124
  %vm129 = vcmask 220160
  %v131 = vsel %vm129, %v82, 0
  %v134 = vsel %vm129, %v83, 0
  %v137 = vsel %vm129, %v84, 0
  %v140 = vsel %vm129, %v85, 0
  %v143 = vsel %vm129, %v86, 0
  %v146 = vsel %vm129, %v87, 0
  %v149 = vsel %vm129, %v88, 0
  %v152 = vsel %vm129, %v89, 0
  %v155 = vsel %vm129, %v90, 0
  %v158 = vsel %vm129, %v91, 0
  %v161 = vsel %vm129, %v92, 0
  %v164 = vsel %vm129, %v93, 0
  %v167 = vsel %vm129, %v94, 0
  %v170 = vsel %vm129, %v95, 0
  %v173 = vsel %vm129, %v96, 0
  %v176 = vsel %vm129, %v97, 0
  %v179 = vsel %vm129, %v98, 0
  %v182 = vsel %vm129, %v99, 0
  %v185 = vsel %vm129, %v100, 0
  %v188 = vsel %vm129, %v101, 0
  %v191 = vsel %vm129, %v102, 0
  %v194 = vsel %vm129, %v103, 0
  %v197 = vsel %vm129, %v104, 0
  %v200 = vsel %vm129, %v105, 0
  %v203 = vsel %vm129, %v106, 0
  %v206 = vsel %vm129, %v107, 0
  %v209 = vsel %vm129, %v108, 0
  %v212 = vsel %vm129, %v109, 0
  %v215 = vsel %vm129, %v110, 0
  %v218 = vsel %vm129, %v111, 0
  %v221 = vsel %vm129, %v112, 0
  %v224 = vsel %vm129, %v113, 0
  %vm226 = vcmask 1044480
  %vm227 = vcmask 1045504
  %v228 = vsel %vm226, 4294967295, 65535
  %v229 = vsel %vm227, %v228, 0
  %v231 = vand.u32 %v127, %v229
  %233 = vmatpush.bf16.msra.mxu0 0
  %234 = vmatpush.bf16.msra.mxu0 0
  %235 = vmatpush.bf16.msra.mxu0 0
  %236 = vmatpush.bf16.msra.mxu0 0
  %237 = vmatpush.bf16.msra.mxu0 0
  %238 = vmatpush.bf16.msra.mxu0 0
  %239 = vmatpush.bf16.msra.mxu0 %v231
  %240 = vmatpush.bf16.msra.mxu0 %v126
  %241 = vmatmul.bf16.gmra.mxu0 %v131
  %v242 = vpop.f32.mrf.mxu0
  %v243 = vadd.f32 0.0, %v242
  %v244 = vpop.f32.mrf.mxu0
  %v245 = vadd.f32 0.0, %v244
  %246 = vmatmul.bf16.gmra.mxu0 %v134
  %v247 = vpop.f32.mrf.mxu0
  %v248 = vadd.f32 0.0, %v247
  %v249 = vpop.f32.mrf.mxu0
  %v250 = vadd.f32 0.0, %v249
  %251 = vmatmul.bf16.gmra.mxu0 %v137
  %v252 = vpop.f32.mrf.mxu0
  %v253 = vadd.f32 0.0, %v252
  %v254 = vpop.f32.mrf.mxu0
  %v255 = vadd.f32 0.0, %v254
  %256 = vmatmul.bf16.gmra.mxu0 %v140
  %v257 = vpop.f32.mrf.mxu0
  %v258 = vadd.f32 0.0, %v257
  %v259 = vpop.f32.mrf.mxu0
  %v260 = vadd.f32 0.0, %v259
  %261 = vmatmul.bf16.gmra.mxu0 %v143
  %v262 = vpop.f32.mrf.mxu0
  %v263 = vadd.f32 0.0, %v262
  %v264 = vpop.f32.mrf.mxu0
  %v265 = vadd.f32 0.0, %v264
  %266 = vmatmul.bf16.gmra.mxu0 %v146
  %v267 = vpop.f32.mrf.mxu0
  %v268 = vadd.f32 0.0, %v267
  %v269 = vpop.f32.mrf.mxu0
  %v270 = vadd.f32 0.0, %v269
  %271 = vmatmul.bf16.gmra.mxu0 %v149
  %v272 = vpop.f32.mrf.mxu0
  %v273 = vadd.f32 0.0, %v272
  %v274 = vpop.f32.mrf.mxu0
  %v275 = vadd.f32 0.0, %v274
  %276 = vmatmul.bf16.gmra.mxu0 %v152
  %v277 = vpop.f32.mrf.mxu0
  %v278 = vadd.f32 0.0, %v277
  %v279 = vpop.f32.mrf.mxu0
  %v280 = vadd.f32 0.0, %v279
  %281 = vmatmul.bf16.gmra.mxu0 %v155
  %v282 = vpop.f32.mrf.mxu0
  %v283 = vadd.f32 0.0, %v282
  %v284 = vpop.f32.mrf.mxu0
  %v285 = vadd.f32 0.0, %v284
  %286 = vmatmul.bf16.gmra.mxu0 %v158
  %v287 = vpop.f32.mrf.mxu0
  %v288 = vadd.f32 0.0, %v287
  %v289 = vpop.f32.mrf.mxu0
  %v290 = vadd.f32 0.0, %v289
  %291 = vmatmul.bf16.gmra.mxu0 %v161
  %v292 = vpop.f32.mrf.mxu0
  %v293 = vadd.f32 0.0, %v292
  %v294 = vpop.f32.mrf.mxu0
  %v295 = vadd.f32 0.0, %v294
  %296 = vmatmul.bf16.gmra.mxu0 %v164
  %v297 = vpop.f32.mrf.mxu0
  %v298 = vadd.f32 0.0, %v297
  %v299 = vpop.f32.mrf.mxu0
  %v300 = vadd.f32 0.0, %v299
  %301 = vmatmul.bf16.gmra.mxu0 %v167
  %v302 = vpop.f32.mrf.mxu0
  %v303 = vadd.f32 0.0, %v302
  %v304 = vpop.f32.mrf.mxu0
  %v305 = vadd.f32 0.0, %v304
  %306 = vmatmul.bf16.gmra.mxu0 %v170
  %v307 = vpop.f32.mrf.mxu0
  %v308 = vadd.f32 0.0, %v307
  %v309 = vpop.f32.mrf.mxu0
  %v310 = vadd.f32 0.0, %v309
  %311 = vmatmul.bf16.gmra.mxu0 %v173
  %v312 = vpop.f32.mrf.mxu0
  %v313 = vadd.f32 0.0, %v312
  %v314 = vpop.f32.mrf.mxu0
  %v315 = vadd.f32 0.0, %v314
  %316 = vmatmul.bf16.gmra.mxu0 %v176
  %v317 = vpop.f32.mrf.mxu0
  %v318 = vadd.f32 0.0, %v317
  %v319 = vpop.f32.mrf.mxu0
  %v320 = vadd.f32 0.0, %v319
  %321 = vmatmul.bf16.gmra.mxu0 %v179
  %v322 = vpop.f32.mrf.mxu0
  %v323 = vadd.f32 0.0, %v322
  %v324 = vpop.f32.mrf.mxu0
  %v325 = vadd.f32 0.0, %v324
  %326 = vmatmul.bf16.gmra.mxu0 %v182
  %v327 = vpop.f32.mrf.mxu0
  %v328 = vadd.f32 0.0, %v327
  %v329 = vpop.f32.mrf.mxu0
  %v330 = vadd.f32 0.0, %v329
  %331 = vmatmul.bf16.gmra.mxu0 %v185
  %v332 = vpop.f32.mrf.mxu0
  %v333 = vadd.f32 0.0, %v332
  %v334 = vpop.f32.mrf.mxu0
  %v335 = vadd.f32 0.0, %v334
  %336 = vmatmul.bf16.gmra.mxu0 %v188
  %v337 = vpop.f32.mrf.mxu0
  %v338 = vadd.f32 0.0, %v337
  %v339 = vpop.f32.mrf.mxu0
  %v340 = vadd.f32 0.0, %v339
  %341 = vmatmul.bf16.gmra.mxu0 %v191
  %v342 = vpop.f32.mrf.mxu0
  %v343 = vadd.f32 0.0, %v342
  %v344 = vpop.f32.mrf.mxu0
  %v345 = vadd.f32 0.0, %v344
  %346 = vmatmul.bf16.gmra.mxu0 %v194
  %v347 = vpop.f32.mrf.mxu0
  %v348 = vadd.f32 0.0, %v347
  %v349 = vpop.f32.mrf.mxu0
  %v350 = vadd.f32 0.0, %v349
  %351 = vmatmul.bf16.gmra.mxu0 %v197
  %v352 = vpop.f32.mrf.mxu0
  %v353 = vadd.f32 0.0, %v352
  %v354 = vpop.f32.mrf.mxu0
  %v355 = vadd.f32 0.0, %v354
  %356 = vmatmul.bf16.gmra.mxu0 %v200
  %v357 = vpop.f32.mrf.mxu0
  %v358 = vadd.f32 0.0, %v357
  %v359 = vpop.f32.mrf.mxu0
  %v360 = vadd.f32 0.0, %v359
  %361 = vmatmul.bf16.gmra.mxu0 %v203
  %v362 = vpop.f32.mrf.mxu0
  %v363 = vadd.f32 0.0, %v362
  %v364 = vpop.f32.mrf.mxu0
  %v365 = vadd.f32 0.0, %v364
  %366 = vmatmul.bf16.gmra.mxu0 %v206
  %v367 = vpop.f32.mrf.mxu0
  %v368 = vadd.f32 0.0, %v367
  %v369 = vpop.f32.mrf.mxu0
  %v370 = vadd.f32 0.0, %v369
  %371 = vmatmul.bf16.gmra.mxu0 %v209
  %v372 = vpop.f32.mrf.mxu0
  %v373 = vadd.f32 0.0, %v372
  %v374 = vpop.f32.mrf.mxu0
  %v375 = vadd.f32 0.0, %v374
  %376 = vmatmul.bf16.gmra.mxu0 %v212
  %v377 = vpop.f32.mrf.mxu0
  %v378 = vadd.f32 0.0, %v377
  %v379 = vpop.f32.mrf.mxu0
  %v380 = vadd.f32 0.0, %v379
  %381 = vmatmul.bf16.gmra.mxu0 %v215
  %v382 = vpop.f32.mrf.mxu0
  %v383 = vadd.f32 0.0, %v382
  %v384 = vpop.f32.mrf.mxu0
  %v385 = vadd.f32 0.0, %v384
  %386 = vmatmul.bf16.gmra.mxu0 %v218
  %v387 = vpop.f32.mrf.mxu0
  %v388 = vadd.f32 0.0, %v387
  %v389 = vpop.f32.mrf.mxu0
  %v390 = vadd.f32 0.0, %v389
  %391 = vmatmul.bf16.gmra.mxu0 %v221
  %v392 = vpop.f32.mrf.mxu0
  %v393 = vadd.f32 0.0, %v392
  %v394 = vpop.f32.mrf.mxu0
  %v395 = vadd.f32 0.0, %v394
  %396 = vmatmul.bf16.gmra.mxu0 %v224
  %v397 = vpop.f32.mrf.mxu0
  %v398 = vadd.f32 0.0, %v397
  %v399 = vpop.f32.mrf.mxu0
  %v400 = vadd.f32 0.0, %v399
  %401 = vdwg.mxu0
  %v402 = vld [vmem:[%s2] sm:$0x1]
  %v404 = vperm.slane %v402, 0
  %v406 = vmul.f32 %v243, %v404
  %v407 = vmul.f32 %v245, %v404
  %v408 = vmul.f32 %v248, %v404
  %v409 = vmul.f32 %v250, %v404
  %v410 = vmul.f32 %v253, %v404
  %v411 = vmul.f32 %v255, %v404
  %v412 = vmul.f32 %v258, %v404
  %v413 = vmul.f32 %v260, %v404
  %v414 = vmul.f32 %v263, %v404
  %v415 = vmul.f32 %v265, %v404
  %v416 = vmul.f32 %v268, %v404
  %v417 = vmul.f32 %v270, %v404
  %v418 = vmul.f32 %v273, %v404
  %v419 = vmul.f32 %v275, %v404
  %v420 = vmul.f32 %v278, %v404
  %v421 = vmul.f32 %v280, %v404
  %v422 = vmul.f32 %v283, %v404
  %v423 = vmul.f32 %v285, %v404
  %v424 = vmul.f32 %v288, %v404
  %v425 = vmul.f32 %v290, %v404
  %v426 = vmul.f32 %v293, %v404
  %v427 = vmul.f32 %v295, %v404
  %v428 = vmul.f32 %v298, %v404
  %v429 = vmul.f32 %v300, %v404
  %v430 = vmul.f32 %v303, %v404
  %v431 = vmul.f32 %v305, %v404
  %v432 = vmul.f32 %v308, %v404
  %v433 = vmul.f32 %v310, %v404
  %v434 = vmul.f32 %v313, %v404
  %v435 = vmul.f32 %v315, %v404
  %v436 = vmul.f32 %v318, %v404
  %v437 = vmul.f32 %v320, %v404
  %v438 = vmul.f32 %v323, %v404
  %v439 = vmul.f32 %v325, %v404
  %v440 = vmul.f32 %v328, %v404
  %v441 = vmul.f32 %v330, %v404
  %v442 = vmul.f32 %v333, %v404
  %v443 = vmul.f32 %v335, %v404
  %v444 = vmul.f32 %v338, %v404
  %v445 = vmul.f32 %v340, %v404
  %v446 = vmul.f32 %v343, %v404
  %v447 = vmul.f32 %v345, %v404
  %v448 = vmul.f32 %v348, %v404
  %v449 = vmul.f32 %v350, %v404
  %v450 = vmul.f32 %v353, %v404
  %v451 = vmul.f32 %v355, %v404
  %v452 = vmul.f32 %v358, %v404
  %v453 = vmul.f32 %v360, %v404
  %v454 = vmul.f32 %v363, %v404
  %v455 = vmul.f32 %v365, %v404
  %v456 = vmul.f32 %v368, %v404
  %v457 = vmul.f32 %v370, %v404
  %v458 = vmul.f32 %v373, %v404
  %v459 = vmul.f32 %v375, %v404
  %v460 = vmul.f32 %v378, %v404
  %v461 = vmul.f32 %v380, %v404
  %v462 = vmul.f32 %v383, %v404
  %v463 = vmul.f32 %v385, %v404
  %v464 = vmul.f32 %v388, %v404
  %v465 = vmul.f32 %v390, %v404
  %v466 = vmul.f32 %v393, %v404
  %v467 = vmul.f32 %v395, %v404
  %v468 = vmul.f32 %v398, %v404
  %v469 = vmul.f32 %v400, %v404
  %v470 = vld [vmem:[%s3] sm:$0x1]
  %v472 = vperm.slane %v470, 0
  %v474 = vadd.f32 %v406, %v472
  %v475 = vadd.f32 %v407, %v472
  %v476 = vadd.f32 %v408, %v472
  %v477 = vadd.f32 %v409, %v472
  %v478 = vadd.f32 %v410, %v472
  %v479 = vadd.f32 %v411, %v472
  %v480 = vadd.f32 %v412, %v472
  %v481 = vadd.f32 %v413, %v472
  %v482 = vadd.f32 %v414, %v472
  %v483 = vadd.f32 %v415, %v472
  %v484 = vadd.f32 %v416, %v472
  %v485 = vadd.f32 %v417, %v472
  %v486 = vadd.f32 %v418, %v472
  %v487 = vadd.f32 %v419, %v472
  %v488 = vadd.f32 %v420, %v472
  %v489 = vadd.f32 %v421, %v472
  %v490 = vadd.f32 %v422, %v472
  %v491 = vadd.f32 %v423, %v472
  %v492 = vadd.f32 %v424, %v472
  %v493 = vadd.f32 %v425, %v472
  %v494 = vadd.f32 %v426, %v472
  %v495 = vadd.f32 %v427, %v472
  %v496 = vadd.f32 %v428, %v472
  %v497 = vadd.f32 %v429, %v472
  %v498 = vadd.f32 %v430, %v472
  %v499 = vadd.f32 %v431, %v472
  %v500 = vadd.f32 %v432, %v472
  %v501 = vadd.f32 %v433, %v472
  %v502 = vadd.f32 %v434, %v472
  %v503 = vadd.f32 %v435, %v472
  %v504 = vadd.f32 %v436, %v472
  %v505 = vadd.f32 %v437, %v472
  %v506 = vadd.f32 %v438, %v472
  %v507 = vadd.f32 %v439, %v472
  %v508 = vadd.f32 %v440, %v472
  %v509 = vadd.f32 %v441, %v472
  %v510 = vadd.f32 %v442, %v472
  %v511 = vadd.f32 %v443, %v472
  %v512 = vadd.f32 %v444, %v472
  %v513 = vadd.f32 %v445, %v472
  %v514 = vadd.f32 %v446, %v472
  %v515 = vadd.f32 %v447, %v472
  %v516 = vadd.f32 %v448, %v472
  %v517 = vadd.f32 %v449, %v472
  %v518 = vadd.f32 %v450, %v472
  %v519 = vadd.f32 %v451, %v472
  %v520 = vadd.f32 %v452, %v472
  %v521 = vadd.f32 %v453, %v472
  %v522 = vadd.f32 %v454, %v472
  %v523 = vadd.f32 %v455, %v472
  %v524 = vadd.f32 %v456, %v472
  %v525 = vadd.f32 %v457, %v472
  %v526 = vadd.f32 %v458, %v472
  %v527 = vadd.f32 %v459, %v472
  %v528 = vadd.f32 %v460, %v472
  %v529 = vadd.f32 %v461, %v472
  %v530 = vadd.f32 %v462, %v472
  %v531 = vadd.f32 %v463, %v472
  %v532 = vadd.f32 %v464, %v472
  %v533 = vadd.f32 %v465, %v472
  %v534 = vadd.f32 %v466, %v472
  %v535 = vadd.f32 %v467, %v472
  %v536 = vadd.f32 %v468, %v472
  %v537 = vadd.f32 %v469, %v472
  %v538 = vxor.u32 %v474, 2147483648
  %v539 = vxor.u32 %v475, 2147483648
  %v540 = vxor.u32 %v476, 2147483648
  %v541 = vxor.u32 %v477, 2147483648
  %v542 = vxor.u32 %v478, 2147483648
  %v543 = vxor.u32 %v479, 2147483648
  %v544 = vxor.u32 %v480, 2147483648
  %v545 = vxor.u32 %v481, 2147483648
  %v546 = vxor.u32 %v482, 2147483648
  %v547 = vxor.u32 %v483, 2147483648
  %v548 = vxor.u32 %v484, 2147483648
  %v549 = vxor.u32 %v485, 2147483648
  %v550 = vxor.u32 %v486, 2147483648
  %v551 = vxor.u32 %v487, 2147483648
  %v552 = vxor.u32 %v488, 2147483648
  %v553 = vxor.u32 %v489, 2147483648
  %v554 = vxor.u32 %v490, 2147483648
  %v555 = vxor.u32 %v491, 2147483648
  %v556 = vxor.u32 %v492, 2147483648
  %v557 = vxor.u32 %v493, 2147483648
  %v558 = vxor.u32 %v494, 2147483648
  %v559 = vxor.u32 %v495, 2147483648
  %v560 = vxor.u32 %v496, 2147483648
  %v561 = vxor.u32 %v497, 2147483648
  %v562 = vxor.u32 %v498, 2147483648
  %v563 = vxor.u32 %v499, 2147483648
  %v564 = vxor.u32 %v500, 2147483648
  %v565 = vxor.u32 %v501, 2147483648
  %v566 = vxor.u32 %v502, 2147483648
  %v567 = vxor.u32 %v503, 2147483648
  %v568 = vxor.u32 %v504, 2147483648
  %v569 = vxor.u32 %v505, 2147483648
  %v570 = vxor.u32 %v506, 2147483648
  %v571 = vxor.u32 %v507, 2147483648
  %v572 = vxor.u32 %v508, 2147483648
  %v573 = vxor.u32 %v509, 2147483648
  %v574 = vxor.u32 %v510, 2147483648
  %v575 = vxor.u32 %v511, 2147483648
  %v576 = vxor.u32 %v512, 2147483648
  %v577 = vxor.u32 %v513, 2147483648
  %v578 = vxor.u32 %v514, 2147483648
  %v579 = vxor.u32 %v515, 2147483648
  %v580 = vxor.u32 %v516, 2147483648
  %v581 = vxor.u32 %v517, 2147483648
  %v582 = vxor.u32 %v518, 2147483648
  %v583 = vxor.u32 %v519, 2147483648
  %v584 = vxor.u32 %v520, 2147483648
  %v585 = vxor.u32 %v521, 2147483648
  %v586 = vxor.u32 %v522, 2147483648
  %v587 = vxor.u32 %v523, 2147483648
  %v588 = vxor.u32 %v524, 2147483648
  %v589 = vxor.u32 %v525, 2147483648
  %v590 = vxor.u32 %v526, 2147483648
  %v591 = vxor.u32 %v527, 2147483648
  %v592 = vxor.u32 %v528, 2147483648
  %v593 = vxor.u32 %v529, 2147483648
  %v594 = vxor.u32 %v530, 2147483648
  %v595 = vxor.u32 %v531, 2147483648
  %v596 = vxor.u32 %v532, 2147483648
  %v597 = vxor.u32 %v533, 2147483648
  %v598 = vxor.u32 %v534, 2147483648
  %v599 = vxor.u32 %v535, 2147483648
  %v600 = vxor.u32 %v536, 2147483648
  %v601 = vxor.u32 %v537, 2147483648
  %v602 = vmul.f32 %v538, 1.442695
  %v603 = vpow.pop %v602
  %v604 = vmul.f32 %v539, 1.442695
  %v605 = vpow.pop %v604
  %v606 = vmul.f32 %v540, 1.442695
  %v607 = vpow.pop %v606
  %v608 = vmul.f32 %v541, 1.442695
  %v609 = vpow.pop %v608
  %v610 = vmul.f32 %v542, 1.442695
  %v611 = vpow.pop %v610
  %v612 = vmul.f32 %v543, 1.442695
  %v613 = vpow.pop %v612
  %v614 = vmul.f32 %v544, 1.442695
  %v615 = vpow.pop %v614
  %v616 = vmul.f32 %v545, 1.442695
  %v617 = vpow.pop %v616
  %v618 = vmul.f32 %v546, 1.442695
  %v619 = vpow.pop %v618
  %v620 = vmul.f32 %v547, 1.442695
  %v621 = vpow.pop %v620
  %v622 = vmul.f32 %v548, 1.442695
  %v623 = vpow.pop %v622
  %v624 = vmul.f32 %v549, 1.442695
  %v625 = vpow.pop %v624
  %v626 = vmul.f32 %v550, 1.442695
  %v627 = vpow.pop %v626
  %v628 = vmul.f32 %v551, 1.442695
  %v629 = vpow.pop %v628
  %v630 = vmul.f32 %v552, 1.442695
  %v631 = vpow.pop %v630
  %v632 = vmul.f32 %v553, 1.442695
  %v633 = vpow.pop %v632
  %v634 = vmul.f32 %v554, 1.442695
  %v635 = vpow.pop %v634
  %v636 = vmul.f32 %v555, 1.442695
  %v637 = vpow.pop %v636
  %v638 = vmul.f32 %v556, 1.442695
  %v639 = vpow.pop %v638
  %v640 = vmul.f32 %v557, 1.442695
  %v641 = vpow.pop %v640
  %v642 = vmul.f32 %v558, 1.442695
  %v643 = vpow.pop %v642
  %v644 = vmul.f32 %v559, 1.442695
  %v645 = vpow.pop %v644
  %v646 = vmul.f32 %v560, 1.442695
  %v647 = vpow.pop %v646
  %v648 = vmul.f32 %v561, 1.442695
  %v649 = vpow.pop %v648
  %v650 = vmul.f32 %v562, 1.442695
  %v651 = vpow.pop %v650
  %v652 = vmul.f32 %v563, 1.442695
  %v653 = vpow.pop %v652
  %v654 = vmul.f32 %v564, 1.442695
  %v655 = vpow.pop %v654
  %v656 = vmul.f32 %v565, 1.442695
  %v657 = vpow.pop %v656
  %v658 = vmul.f32 %v566, 1.442695
  %v659 = vpow.pop %v658
  %v660 = vmul.f32 %v567, 1.442695
  %v661 = vpow.pop %v660
  %v662 = vmul.f32 %v568, 1.442695
  %v663 = vpow.pop %v662
  %v664 = vmul.f32 %v569, 1.442695
  %v665 = vpow.pop %v664
  %v666 = vmul.f32 %v570, 1.442695
  %v667 = vpow.pop %v666
  %v668 = vmul.f32 %v571, 1.442695
  %v669 = vpow.pop %v668
  %v670 = vmul.f32 %v572, 1.442695
  %v671 = vpow.pop %v670
  %v672 = vmul.f32 %v573, 1.442695
  %v673 = vpow.pop %v672
  %v674 = vmul.f32 %v574, 1.442695
  %v675 = vpow.pop %v674
  %v676 = vmul.f32 %v575, 1.442695
  %v677 = vpow.pop %v676
  %v678 = vmul.f32 %v576, 1.442695
  %v679 = vpow.pop %v678
  %v680 = vmul.f32 %v577, 1.442695
  %v681 = vpow.pop %v680
  %v682 = vmul.f32 %v578, 1.442695
  %v683 = vpow.pop %v682
  %v684 = vmul.f32 %v579, 1.442695
  %v685 = vpow.pop %v684
  %v686 = vmul.f32 %v580, 1.442695
  %v687 = vpow.pop %v686
  %v688 = vmul.f32 %v581, 1.442695
  %v689 = vpow.pop %v688
  %v690 = vmul.f32 %v582, 1.442695
  %v691 = vpow.pop %v690
  %v692 = vmul.f32 %v583, 1.442695
  %v693 = vpow.pop %v692
  %v694 = vmul.f32 %v584, 1.442695
  %v695 = vpow.pop %v694
  %v696 = vmul.f32 %v585, 1.442695
  %v697 = vpow.pop %v696
  %v698 = vmul.f32 %v586, 1.442695
  %v699 = vpow.pop %v698
  %v700 = vmul.f32 %v587, 1.442695
  %v701 = vpow.pop %v700
  %v702 = vmul.f32 %v588, 1.442695
  %v703 = vpow.pop %v702
  %v704 = vmul.f32 %v589, 1.442695
  %v705 = vpow.pop %v704
  %v706 = vmul.f32 %v590, 1.442695
  %v707 = vpow.pop %v706
  %v708 = vmul.f32 %v591, 1.442695
  %v709 = vpow.pop %v708
  %v710 = vmul.f32 %v592, 1.442695
  %v711 = vpow.pop %v710
  %v712 = vmul.f32 %v593, 1.442695
  %v713 = vpow.pop %v712
  %v714 = vmul.f32 %v594, 1.442695
  %v715 = vpow.pop %v714
  %v716 = vmul.f32 %v595, 1.442695
  %v717 = vpow.pop %v716
  %v718 = vmul.f32 %v596, 1.442695
  %v719 = vpow.pop %v718
  %v720 = vmul.f32 %v597, 1.442695
  %v721 = vpow.pop %v720
  %v722 = vmul.f32 %v598, 1.442695
  %v723 = vpow.pop %v722
  %v724 = vmul.f32 %v599, 1.442695
  %v725 = vpow.pop %v724
  %v726 = vmul.f32 %v600, 1.442695
  %v727 = vpow.pop %v726
  %v728 = vmul.f32 %v601, 1.442695
  %v729 = vpow.pop %v728
  %v730 = vadd.f32 %v603, 1.0
  %v731 = vadd.f32 %v605, 1.0
  %v732 = vadd.f32 %v607, 1.0
  %v733 = vadd.f32 %v609, 1.0
  %v734 = vadd.f32 %v611, 1.0
  %v735 = vadd.f32 %v613, 1.0
  %v736 = vadd.f32 %v615, 1.0
  %v737 = vadd.f32 %v617, 1.0
  %v738 = vadd.f32 %v619, 1.0
  %v739 = vadd.f32 %v621, 1.0
  %v740 = vadd.f32 %v623, 1.0
  %v741 = vadd.f32 %v625, 1.0
  %v742 = vadd.f32 %v627, 1.0
  %v743 = vadd.f32 %v629, 1.0
  %v744 = vadd.f32 %v631, 1.0
  %v745 = vadd.f32 %v633, 1.0
  %v746 = vadd.f32 %v635, 1.0
  %v747 = vadd.f32 %v637, 1.0
  %v748 = vadd.f32 %v639, 1.0
  %v749 = vadd.f32 %v641, 1.0
  %v750 = vadd.f32 %v643, 1.0
  %v751 = vadd.f32 %v645, 1.0
  %v752 = vadd.f32 %v647, 1.0
  %v753 = vadd.f32 %v649, 1.0
  %v754 = vadd.f32 %v651, 1.0
  %v755 = vadd.f32 %v653, 1.0
  %v756 = vadd.f32 %v655, 1.0
  %v757 = vadd.f32 %v657, 1.0
  %v758 = vadd.f32 %v659, 1.0
  %v759 = vadd.f32 %v661, 1.0
  %v760 = vadd.f32 %v663, 1.0
  %v761 = vadd.f32 %v665, 1.0
  %v762 = vadd.f32 %v667, 1.0
  %v763 = vadd.f32 %v669, 1.0
  %v764 = vadd.f32 %v671, 1.0
  %v765 = vadd.f32 %v673, 1.0
  %v766 = vadd.f32 %v675, 1.0
  %v767 = vadd.f32 %v677, 1.0
  %v768 = vadd.f32 %v679, 1.0
  %v769 = vadd.f32 %v681, 1.0
  %v770 = vadd.f32 %v683, 1.0
  %v771 = vadd.f32 %v685, 1.0
  %v772 = vadd.f32 %v687, 1.0
  %v773 = vadd.f32 %v689, 1.0
  %v774 = vadd.f32 %v691, 1.0
  %v775 = vadd.f32 %v693, 1.0
  %v776 = vadd.f32 %v695, 1.0
  %v777 = vadd.f32 %v697, 1.0
  %v778 = vadd.f32 %v699, 1.0
  %v779 = vadd.f32 %v701, 1.0
  %v780 = vadd.f32 %v703, 1.0
  %v781 = vadd.f32 %v705, 1.0
  %v782 = vadd.f32 %v707, 1.0
  %v783 = vadd.f32 %v709, 1.0
  %v784 = vadd.f32 %v711, 1.0
  %v785 = vadd.f32 %v713, 1.0
  %v786 = vadd.f32 %v715, 1.0
  %v787 = vadd.f32 %v717, 1.0
  %v788 = vadd.f32 %v719, 1.0
  %v789 = vadd.f32 %v721, 1.0
  %v790 = vadd.f32 %v723, 1.0
  %v791 = vadd.f32 %v725, 1.0
  %v792 = vadd.f32 %v727, 1.0
  %v793 = vadd.f32 %v729, 1.0
  %v794 = vrcp.pop %v730
  %v795 = vmul.f32 %v730, %v794
  %v796 = vsub.f32 1.0, %v795
  %v797 = vmul.f32 %v794, %v796
  %v798 = vadd.f32 %v794, %v797
  %vm799 = vweird.f32 %v730
  %vm800 = vweird.f32 %v794
  %vm801 = vmor %vm799, %vm800
  %v802 = vsel %vm801, %v794, %v798
  %v803 = vand.u32 2147483647, %v730
  %vm804 = vcmp.eq.f32.partialorder %v803, 8.507059e+37
  %v805 = vand.u32 %v730, 2147483648
  %v806 = vor.u32 1.1754944e-38, %v805
  %v807 = vsel %vm804, %v806, %v802
  %v808 = vmul.f32 1.0, %v807
  %v809 = vrcp.pop %v731
  %v810 = vmul.f32 %v731, %v809
  %v811 = vsub.f32 1.0, %v810
  %v812 = vmul.f32 %v809, %v811
  %v813 = vadd.f32 %v809, %v812
  %vm814 = vweird.f32 %v731
  %vm815 = vweird.f32 %v809
  %vm816 = vmor %vm814, %vm815
  %v817 = vsel %vm816, %v809, %v813
  %v818 = vand.u32 2147483647, %v731
  %vm819 = vcmp.eq.f32.partialorder %v818, 8.507059e+37
  %v820 = vand.u32 %v731, 2147483648
  %v821 = vor.u32 1.1754944e-38, %v820
  %v822 = vsel %vm819, %v821, %v817
  %v823 = vmul.f32 1.0, %v822
  %v824 = vrcp.pop %v732
  %v825 = vmul.f32 %v732, %v824
  %v826 = vsub.f32 1.0, %v825
  %v827 = vmul.f32 %v824, %v826
  %v828 = vadd.f32 %v824, %v827
  %vm829 = vweird.f32 %v732
  %vm830 = vweird.f32 %v824
  %vm831 = vmor %vm829, %vm830
  %v832 = vsel %vm831, %v824, %v828
  %v833 = vand.u32 2147483647, %v732
  %vm834 = vcmp.eq.f32.partialorder %v833, 8.507059e+37
  %v835 = vand.u32 %v732, 2147483648
  %v836 = vor.u32 1.1754944e-38, %v835
  %v837 = vsel %vm834, %v836, %v832
  %v838 = vmul.f32 1.0, %v837
  %v839 = vrcp.pop %v733
  %v840 = vmul.f32 %v733, %v839
  %v841 = vsub.f32 1.0, %v840
  %v842 = vmul.f32 %v839, %v841
  %v843 = vadd.f32 %v839, %v842
  %vm844 = vweird.f32 %v733
  %vm845 = vweird.f32 %v839
  %vm846 = vmor %vm844, %vm845
  %v847 = vsel %vm846, %v839, %v843
  %v848 = vand.u32 2147483647, %v733
  %vm849 = vcmp.eq.f32.partialorder %v848, 8.507059e+37
  %v850 = vand.u32 %v733, 2147483648
  %v851 = vor.u32 1.1754944e-38, %v850
  %v852 = vsel %vm849, %v851, %v847
  %v853 = vmul.f32 1.0, %v852
  %v854 = vrcp.pop %v734
  %v855 = vmul.f32 %v734, %v854
  %v856 = vsub.f32 1.0, %v855
  %v857 = vmul.f32 %v854, %v856
  %v858 = vadd.f32 %v854, %v857
  %vm859 = vweird.f32 %v734
  %vm860 = vweird.f32 %v854
  %vm861 = vmor %vm859, %vm860
  %v862 = vsel %vm861, %v854, %v858
  %v863 = vand.u32 2147483647, %v734
  %vm864 = vcmp.eq.f32.partialorder %v863, 8.507059e+37
  %v865 = vand.u32 %v734, 2147483648
  %v866 = vor.u32 1.1754944e-38, %v865
  %v867 = vsel %vm864, %v866, %v862
  %v868 = vmul.f32 1.0, %v867
  %v869 = vrcp.pop %v735
  %v870 = vmul.f32 %v735, %v869
  %v871 = vsub.f32 1.0, %v870
  %v872 = vmul.f32 %v869, %v871
  %v873 = vadd.f32 %v869, %v872
  %vm874 = vweird.f32 %v735
  %vm875 = vweird.f32 %v869
  %vm876 = vmor %vm874, %vm875
  %v877 = vsel %vm876, %v869, %v873
  %v878 = vand.u32 2147483647, %v735
  %vm879 = vcmp.eq.f32.partialorder %v878, 8.507059e+37
  %v880 = vand.u32 %v735, 2147483648
  %v881 = vor.u32 1.1754944e-38, %v880
  %v882 = vsel %vm879, %v881, %v877
  %v883 = vmul.f32 1.0, %v882
  %v884 = vrcp.pop %v736
  %v885 = vmul.f32 %v736, %v884
  %v886 = vsub.f32 1.0, %v885
  %v887 = vmul.f32 %v884, %v886
  %v888 = vadd.f32 %v884, %v887
  %vm889 = vweird.f32 %v736
  %vm890 = vweird.f32 %v884
  %vm891 = vmor %vm889, %vm890
  %v892 = vsel %vm891, %v884, %v888
  %v893 = vand.u32 2147483647, %v736
  %vm894 = vcmp.eq.f32.partialorder %v893, 8.507059e+37
  %v895 = vand.u32 %v736, 2147483648
  %v896 = vor.u32 1.1754944e-38, %v895
  %v897 = vsel %vm894, %v896, %v892
  %v898 = vmul.f32 1.0, %v897
  %v899 = vrcp.pop %v737
  %v900 = vmul.f32 %v737, %v899
  %v901 = vsub.f32 1.0, %v900
  %v902 = vmul.f32 %v899, %v901
  %v903 = vadd.f32 %v899, %v902
  %vm904 = vweird.f32 %v737
  %vm905 = vweird.f32 %v899
  %vm906 = vmor %vm904, %vm905
  %v907 = vsel %vm906, %v899, %v903
  %v908 = vand.u32 2147483647, %v737
  %vm909 = vcmp.eq.f32.partialorder %v908, 8.507059e+37
  %v910 = vand.u32 %v737, 2147483648
  %v911 = vor.u32 1.1754944e-38, %v910
  %v912 = vsel %vm909, %v911, %v907
  %v913 = vmul.f32 1.0, %v912
  %v914 = vrcp.pop %v738
  %v915 = vmul.f32 %v738, %v914
  %v916 = vsub.f32 1.0, %v915
  %v917 = vmul.f32 %v914, %v916
  %v918 = vadd.f32 %v914, %v917
  %vm919 = vweird.f32 %v738
  %vm920 = vweird.f32 %v914
  %vm921 = vmor %vm919, %vm920
  %v922 = vsel %vm921, %v914, %v918
  %v923 = vand.u32 2147483647, %v738
  %vm924 = vcmp.eq.f32.partialorder %v923, 8.507059e+37
  %v925 = vand.u32 %v738, 2147483648
  %v926 = vor.u32 1.1754944e-38, %v925
  %v927 = vsel %vm924, %v926, %v922
  %v928 = vmul.f32 1.0, %v927
  %v929 = vrcp.pop %v739
  %v930 = vmul.f32 %v739, %v929
  %v931 = vsub.f32 1.0, %v930
  %v932 = vmul.f32 %v929, %v931
  %v933 = vadd.f32 %v929, %v932
  %vm934 = vweird.f32 %v739
  %vm935 = vweird.f32 %v929
  %vm936 = vmor %vm934, %vm935
  %v937 = vsel %vm936, %v929, %v933
  %v938 = vand.u32 2147483647, %v739
  %vm939 = vcmp.eq.f32.partialorder %v938, 8.507059e+37
  %v940 = vand.u32 %v739, 2147483648
  %v941 = vor.u32 1.1754944e-38, %v940
  %v942 = vsel %vm939, %v941, %v937
  %v943 = vmul.f32 1.0, %v942
  %v944 = vrcp.pop %v740
  %v945 = vmul.f32 %v740, %v944
  %v946 = vsub.f32 1.0, %v945
  %v947 = vmul.f32 %v944, %v946
  %v948 = vadd.f32 %v944, %v947
  %vm949 = vweird.f32 %v740
  %vm950 = vweird.f32 %v944
  %vm951 = vmor %vm949, %vm950
  %v952 = vsel %vm951, %v944, %v948
  %v953 = vand.u32 2147483647, %v740
  %vm954 = vcmp.eq.f32.partialorder %v953, 8.507059e+37
  %v955 = vand.u32 %v740, 2147483648
  %v956 = vor.u32 1.1754944e-38, %v955
  %v957 = vsel %vm954, %v956, %v952
  %v958 = vmul.f32 1.0, %v957
  %v959 = vrcp.pop %v741
  %v960 = vmul.f32 %v741, %v959
  %v961 = vsub.f32 1.0, %v960
  %v962 = vmul.f32 %v959, %v961
  %v963 = vadd.f32 %v959, %v962
  %vm964 = vweird.f32 %v741
  %vm965 = vweird.f32 %v959
  %vm966 = vmor %vm964, %vm965
  %v967 = vsel %vm966, %v959, %v963
  %v968 = vand.u32 2147483647, %v741
  %vm969 = vcmp.eq.f32.partialorder %v968, 8.507059e+37
  %v970 = vand.u32 %v741, 2147483648
  %v971 = vor.u32 1.1754944e-38, %v970
  %v972 = vsel %vm969, %v971, %v967
  %v973 = vmul.f32 1.0, %v972
  %v974 = vrcp.pop %v742
  %v975 = vmul.f32 %v742, %v974
  %v976 = vsub.f32 1.0, %v975
  %v977 = vmul.f32 %v974, %v976
  %v978 = vadd.f32 %v974, %v977
  %vm979 = vweird.f32 %v742
  %vm980 = vweird.f32 %v974
  %vm981 = vmor %vm979, %vm980
  %v982 = vsel %vm981, %v974, %v978
  %v983 = vand.u32 2147483647, %v742
  %vm984 = vcmp.eq.f32.partialorder %v983, 8.507059e+37
  %v985 = vand.u32 %v742, 2147483648
  %v986 = vor.u32 1.1754944e-38, %v985
  %v987 = vsel %vm984, %v986, %v982
  %v988 = vmul.f32 1.0, %v987
  %v989 = vrcp.pop %v743
  %v990 = vmul.f32 %v743, %v989
  %v991 = vsub.f32 1.0, %v990
  %v992 = vmul.f32 %v989, %v991
  %v993 = vadd.f32 %v989, %v992
  %vm994 = vweird.f32 %v743
  %vm995 = vweird.f32 %v989
  %vm996 = vmor %vm994, %vm995
  %v997 = vsel %vm996, %v989, %v993
  %v998 = vand.u32 2147483647, %v743
  %vm999 = vcmp.eq.f32.partialorder %v998, 8.507059e+37
  %v1000 = vand.u32 %v743, 2147483648
  %v1001 = vor.u32 1.1754944e-38, %v1000
  %v1002 = vsel %vm999, %v1001, %v997
  %v1003 = vmul.f32 1.0, %v1002
  %v1004 = vrcp.pop %v744
  %v1005 = vmul.f32 %v744, %v1004
  %v1006 = vsub.f32 1.0, %v1005
  %v1007 = vmul.f32 %v1004, %v1006
  %v1008 = vadd.f32 %v1004, %v1007
  %vm1009 = vweird.f32 %v744
  %vm1010 = vweird.f32 %v1004
  %vm1011 = vmor %vm1009, %vm1010
  %v1012 = vsel %vm1011, %v1004, %v1008
  %v1013 = vand.u32 2147483647, %v744
  %vm1014 = vcmp.eq.f32.partialorder %v1013, 8.507059e+37
  %v1015 = vand.u32 %v744, 2147483648
  %v1016 = vor.u32 1.1754944e-38, %v1015
  %v1017 = vsel %vm1014, %v1016, %v1012
  %v1018 = vmul.f32 1.0, %v1017
  %v1019 = vrcp.pop %v745
  %v1020 = vmul.f32 %v745, %v1019
  %v1021 = vsub.f32 1.0, %v1020
  %v1022 = vmul.f32 %v1019, %v1021
  %v1023 = vadd.f32 %v1019, %v1022
  %vm1024 = vweird.f32 %v745
  %vm1025 = vweird.f32 %v1019
  %vm1026 = vmor %vm1024, %vm1025
  %v1027 = vsel %vm1026, %v1019, %v1023
  %v1028 = vand.u32 2147483647, %v745
  %vm1029 = vcmp.eq.f32.partialorder %v1028, 8.507059e+37
  %v1030 = vand.u32 %v745, 2147483648
  %v1031 = vor.u32 1.1754944e-38, %v1030
  %v1032 = vsel %vm1029, %v1031, %v1027
  %v1033 = vmul.f32 1.0, %v1032
  %v1034 = vrcp.pop %v746
  %v1035 = vmul.f32 %v746, %v1034
  %v1036 = vsub.f32 1.0, %v1035
  %v1037 = vmul.f32 %v1034, %v1036
  %v1038 = vadd.f32 %v1034, %v1037
  %vm1039 = vweird.f32 %v746
  %vm1040 = vweird.f32 %v1034
  %vm1041 = vmor %vm1039, %vm1040
  %v1042 = vsel %vm1041, %v1034, %v1038
  %v1043 = vand.u32 2147483647, %v746
  %vm1044 = vcmp.eq.f32.partialorder %v1043, 8.507059e+37
  %v1045 = vand.u32 %v746, 2147483648
  %v1046 = vor.u32 1.1754944e-38, %v1045
  %v1047 = vsel %vm1044, %v1046, %v1042
  %v1048 = vmul.f32 1.0, %v1047
  %v1049 = vrcp.pop %v747
  %v1050 = vmul.f32 %v747, %v1049
  %v1051 = vsub.f32 1.0, %v1050
  %v1052 = vmul.f32 %v1049, %v1051
  %v1053 = vadd.f32 %v1049, %v1052
  %vm1054 = vweird.f32 %v747
  %vm1055 = vweird.f32 %v1049
  %vm1056 = vmor %vm1054, %vm1055
  %v1057 = vsel %vm1056, %v1049, %v1053
  %v1058 = vand.u32 2147483647, %v747
  %vm1059 = vcmp.eq.f32.partialorder %v1058, 8.507059e+37
  %v1060 = vand.u32 %v747, 2147483648
  %v1061 = vor.u32 1.1754944e-38, %v1060
  %v1062 = vsel %vm1059, %v1061, %v1057
  %v1063 = vmul.f32 1.0, %v1062
  %v1064 = vrcp.pop %v748
  %v1065 = vmul.f32 %v748, %v1064
  %v1066 = vsub.f32 1.0, %v1065
  %v1067 = vmul.f32 %v1064, %v1066
  %v1068 = vadd.f32 %v1064, %v1067
  %vm1069 = vweird.f32 %v748
  %vm1070 = vweird.f32 %v1064
  %vm1071 = vmor %vm1069, %vm1070
  %v1072 = vsel %vm1071, %v1064, %v1068
  %v1073 = vand.u32 2147483647, %v748
  %vm1074 = vcmp.eq.f32.partialorder %v1073, 8.507059e+37
  %v1075 = vand.u32 %v748, 2147483648
  %v1076 = vor.u32 1.1754944e-38, %v1075
  %v1077 = vsel %vm1074, %v1076, %v1072
  %v1078 = vmul.f32 1.0, %v1077
  %v1079 = vrcp.pop %v749
  %v1080 = vmul.f32 %v749, %v1079
  %v1081 = vsub.f32 1.0, %v1080
  %v1082 = vmul.f32 %v1079, %v1081
  %v1083 = vadd.f32 %v1079, %v1082
  %vm1084 = vweird.f32 %v749
  %vm1085 = vweird.f32 %v1079
  %vm1086 = vmor %vm1084, %vm1085
  %v1087 = vsel %vm1086, %v1079, %v1083
  %v1088 = vand.u32 2147483647, %v749
  %vm1089 = vcmp.eq.f32.partialorder %v1088, 8.507059e+37
  %v1090 = vand.u32 %v749, 2147483648
  %v1091 = vor.u32 1.1754944e-38, %v1090
  %v1092 = vsel %vm1089, %v1091, %v1087
  %v1093 = vmul.f32 1.0, %v1092
  %v1094 = vrcp.pop %v750
  %v1095 = vmul.f32 %v750, %v1094
  %v1096 = vsub.f32 1.0, %v1095
  %v1097 = vmul.f32 %v1094, %v1096
  %v1098 = vadd.f32 %v1094, %v1097
  %vm1099 = vweird.f32 %v750
  %vm1100 = vweird.f32 %v1094
  %vm1101 = vmor %vm1099, %vm1100
  %v1102 = vsel %vm1101, %v1094, %v1098
  %v1103 = vand.u32 2147483647, %v750
  %vm1104 = vcmp.eq.f32.partialorder %v1103, 8.507059e+37
  %v1105 = vand.u32 %v750, 2147483648
  %v1106 = vor.u32 1.1754944e-38, %v1105
  %v1107 = vsel %vm1104, %v1106, %v1102
  %v1108 = vmul.f32 1.0, %v1107
  %v1109 = vrcp.pop %v751
  %v1110 = vmul.f32 %v751, %v1109
  %v1111 = vsub.f32 1.0, %v1110
  %v1112 = vmul.f32 %v1109, %v1111
  %v1113 = vadd.f32 %v1109, %v1112
  %vm1114 = vweird.f32 %v751
  %vm1115 = vweird.f32 %v1109
  %vm1116 = vmor %vm1114, %vm1115
  %v1117 = vsel %vm1116, %v1109, %v1113
  %v1118 = vand.u32 2147483647, %v751
  %vm1119 = vcmp.eq.f32.partialorder %v1118, 8.507059e+37
  %v1120 = vand.u32 %v751, 2147483648
  %v1121 = vor.u32 1.1754944e-38, %v1120
  %v1122 = vsel %vm1119, %v1121, %v1117
  %v1123 = vmul.f32 1.0, %v1122
  %v1124 = vrcp.pop %v752
  %v1125 = vmul.f32 %v752, %v1124
  %v1126 = vsub.f32 1.0, %v1125
  %v1127 = vmul.f32 %v1124, %v1126
  %v1128 = vadd.f32 %v1124, %v1127
  %vm1129 = vweird.f32 %v752
  %vm1130 = vweird.f32 %v1124
  %vm1131 = vmor %vm1129, %vm1130
  %v1132 = vsel %vm1131, %v1124, %v1128
  %v1133 = vand.u32 2147483647, %v752
  %vm1134 = vcmp.eq.f32.partialorder %v1133, 8.507059e+37
  %v1135 = vand.u32 %v752, 2147483648
  %v1136 = vor.u32 1.1754944e-38, %v1135
  %v1137 = vsel %vm1134, %v1136, %v1132
  %v1138 = vmul.f32 1.0, %v1137
  %v1139 = vrcp.pop %v753
  %v1140 = vmul.f32 %v753, %v1139
  %v1141 = vsub.f32 1.0, %v1140
  %v1142 = vmul.f32 %v1139, %v1141
  %v1143 = vadd.f32 %v1139, %v1142
  %vm1144 = vweird.f32 %v753
  %vm1145 = vweird.f32 %v1139
  %vm1146 = vmor %vm1144, %vm1145
  %v1147 = vsel %vm1146, %v1139, %v1143
  %v1148 = vand.u32 2147483647, %v753
  %vm1149 = vcmp.eq.f32.partialorder %v1148, 8.507059e+37
  %v1150 = vand.u32 %v753, 2147483648
  %v1151 = vor.u32 1.1754944e-38, %v1150
  %v1152 = vsel %vm1149, %v1151, %v1147
  %v1153 = vmul.f32 1.0, %v1152
  %v1154 = vrcp.pop %v754
  %v1155 = vmul.f32 %v754, %v1154
  %v1156 = vsub.f32 1.0, %v1155
  %v1157 = vmul.f32 %v1154, %v1156
  %v1158 = vadd.f32 %v1154, %v1157
  %vm1159 = vweird.f32 %v754
  %vm1160 = vweird.f32 %v1154
  %vm1161 = vmor %vm1159, %vm1160
  %v1162 = vsel %vm1161, %v1154, %v1158
  %v1163 = vand.u32 2147483647, %v754
  %vm1164 = vcmp.eq.f32.partialorder %v1163, 8.507059e+37
  %v1165 = vand.u32 %v754, 2147483648
  %v1166 = vor.u32 1.1754944e-38, %v1165
  %v1167 = vsel %vm1164, %v1166, %v1162
  %v1168 = vmul.f32 1.0, %v1167
  %v1169 = vrcp.pop %v755
  %v1170 = vmul.f32 %v755, %v1169
  %v1171 = vsub.f32 1.0, %v1170
  %v1172 = vmul.f32 %v1169, %v1171
  %v1173 = vadd.f32 %v1169, %v1172
  %vm1174 = vweird.f32 %v755
  %vm1175 = vweird.f32 %v1169
  %vm1176 = vmor %vm1174, %vm1175
  %v1177 = vsel %vm1176, %v1169, %v1173
  %v1178 = vand.u32 2147483647, %v755
  %vm1179 = vcmp.eq.f32.partialorder %v1178, 8.507059e+37
  %v1180 = vand.u32 %v755, 2147483648
  %v1181 = vor.u32 1.1754944e-38, %v1180
  %v1182 = vsel %vm1179, %v1181, %v1177
  %v1183 = vmul.f32 1.0, %v1182
  %v1184 = vrcp.pop %v756
  %v1185 = vmul.f32 %v756, %v1184
  %v1186 = vsub.f32 1.0, %v1185
  %v1187 = vmul.f32 %v1184, %v1186
  %v1188 = vadd.f32 %v1184, %v1187
  %vm1189 = vweird.f32 %v756
  %vm1190 = vweird.f32 %v1184
  %vm1191 = vmor %vm1189, %vm1190
  %v1192 = vsel %vm1191, %v1184, %v1188
  %v1193 = vand.u32 2147483647, %v756
  %vm1194 = vcmp.eq.f32.partialorder %v1193, 8.507059e+37
  %v1195 = vand.u32 %v756, 2147483648
  %v1196 = vor.u32 1.1754944e-38, %v1195
  %v1197 = vsel %vm1194, %v1196, %v1192
  %v1198 = vmul.f32 1.0, %v1197
  %v1199 = vrcp.pop %v757
  %v1200 = vmul.f32 %v757, %v1199
  %v1201 = vsub.f32 1.0, %v1200
  %v1202 = vmul.f32 %v1199, %v1201
  %v1203 = vadd.f32 %v1199, %v1202
  %vm1204 = vweird.f32 %v757
  %vm1205 = vweird.f32 %v1199
  %vm1206 = vmor %vm1204, %vm1205
  %v1207 = vsel %vm1206, %v1199, %v1203
  %v1208 = vand.u32 2147483647, %v757
  %vm1209 = vcmp.eq.f32.partialorder %v1208, 8.507059e+37
  %v1210 = vand.u32 %v757, 2147483648
  %v1211 = vor.u32 1.1754944e-38, %v1210
  %v1212 = vsel %vm1209, %v1211, %v1207
  %v1213 = vmul.f32 1.0, %v1212
  %v1214 = vrcp.pop %v758
  %v1215 = vmul.f32 %v758, %v1214
  %v1216 = vsub.f32 1.0, %v1215
  %v1217 = vmul.f32 %v1214, %v1216
  %v1218 = vadd.f32 %v1214, %v1217
  %vm1219 = vweird.f32 %v758
  %vm1220 = vweird.f32 %v1214
  %vm1221 = vmor %vm1219, %vm1220
  %v1222 = vsel %vm1221, %v1214, %v1218
  %v1223 = vand.u32 2147483647, %v758
  %vm1224 = vcmp.eq.f32.partialorder %v1223, 8.507059e+37
  %v1225 = vand.u32 %v758, 2147483648
  %v1226 = vor.u32 1.1754944e-38, %v1225
  %v1227 = vsel %vm1224, %v1226, %v1222
  %v1228 = vmul.f32 1.0, %v1227
  %v1229 = vrcp.pop %v759
  %v1230 = vmul.f32 %v759, %v1229
  %v1231 = vsub.f32 1.0, %v1230
  %v1232 = vmul.f32 %v1229, %v1231
  %v1233 = vadd.f32 %v1229, %v1232
  %vm1234 = vweird.f32 %v759
  %vm1235 = vweird.f32 %v1229
  %vm1236 = vmor %vm1234, %vm1235
  %v1237 = vsel %vm1236, %v1229, %v1233
  %v1238 = vand.u32 2147483647, %v759
  %vm1239 = vcmp.eq.f32.partialorder %v1238, 8.507059e+37
  %v1240 = vand.u32 %v759, 2147483648
  %v1241 = vor.u32 1.1754944e-38, %v1240
  %v1242 = vsel %vm1239, %v1241, %v1237
  %v1243 = vmul.f32 1.0, %v1242
  %v1244 = vrcp.pop %v760
  %v1245 = vmul.f32 %v760, %v1244
  %v1246 = vsub.f32 1.0, %v1245
  %v1247 = vmul.f32 %v1244, %v1246
  %v1248 = vadd.f32 %v1244, %v1247
  %vm1249 = vweird.f32 %v760
  %vm1250 = vweird.f32 %v1244
  %vm1251 = vmor %vm1249, %vm1250
  %v1252 = vsel %vm1251, %v1244, %v1248
  %v1253 = vand.u32 2147483647, %v760
  %vm1254 = vcmp.eq.f32.partialorder %v1253, 8.507059e+37
  %v1255 = vand.u32 %v760, 2147483648
  %v1256 = vor.u32 1.1754944e-38, %v1255
  %v1257 = vsel %vm1254, %v1256, %v1252
  %v1258 = vmul.f32 1.0, %v1257
  %v1259 = vrcp.pop %v761
  %v1260 = vmul.f32 %v761, %v1259
  %v1261 = vsub.f32 1.0, %v1260
  %v1262 = vmul.f32 %v1259, %v1261
  %v1263 = vadd.f32 %v1259, %v1262
  %vm1264 = vweird.f32 %v761
  %vm1265 = vweird.f32 %v1259
  %vm1266 = vmor %vm1264, %vm1265
  %v1267 = vsel %vm1266, %v1259, %v1263
  %v1268 = vand.u32 2147483647, %v761
  %vm1269 = vcmp.eq.f32.partialorder %v1268, 8.507059e+37
  %v1270 = vand.u32 %v761, 2147483648
  %v1271 = vor.u32 1.1754944e-38, %v1270
  %v1272 = vsel %vm1269, %v1271, %v1267
  %v1273 = vmul.f32 1.0, %v1272
  %v1274 = vrcp.pop %v762
  %v1275 = vmul.f32 %v762, %v1274
  %v1276 = vsub.f32 1.0, %v1275
  %v1277 = vmul.f32 %v1274, %v1276
  %v1278 = vadd.f32 %v1274, %v1277
  %vm1279 = vweird.f32 %v762
  %vm1280 = vweird.f32 %v1274
  %vm1281 = vmor %vm1279, %vm1280
  %v1282 = vsel %vm1281, %v1274, %v1278
  %v1283 = vand.u32 2147483647, %v762
  %vm1284 = vcmp.eq.f32.partialorder %v1283, 8.507059e+37
  %v1285 = vand.u32 %v762, 2147483648
  %v1286 = vor.u32 1.1754944e-38, %v1285
  %v1287 = vsel %vm1284, %v1286, %v1282
  %v1288 = vmul.f32 1.0, %v1287
  %v1289 = vrcp.pop %v763
  %v1290 = vmul.f32 %v763, %v1289
  %v1291 = vsub.f32 1.0, %v1290
  %v1292 = vmul.f32 %v1289, %v1291
  %v1293 = vadd.f32 %v1289, %v1292
  %vm1294 = vweird.f32 %v763
  %vm1295 = vweird.f32 %v1289
  %vm1296 = vmor %vm1294, %vm1295
  %v1297 = vsel %vm1296, %v1289, %v1293
  %v1298 = vand.u32 2147483647, %v763
  %vm1299 = vcmp.eq.f32.partialorder %v1298, 8.507059e+37
  %v1300 = vand.u32 %v763, 2147483648
  %v1301 = vor.u32 1.1754944e-38, %v1300
  %v1302 = vsel %vm1299, %v1301, %v1297
  %v1303 = vmul.f32 1.0, %v1302
  %v1304 = vrcp.pop %v764
  %v1305 = vmul.f32 %v764, %v1304
  %v1306 = vsub.f32 1.0, %v1305
  %v1307 = vmul.f32 %v1304, %v1306
  %v1308 = vadd.f32 %v1304, %v1307
  %vm1309 = vweird.f32 %v764
  %vm1310 = vweird.f32 %v1304
  %vm1311 = vmor %vm1309, %vm1310
  %v1312 = vsel %vm1311, %v1304, %v1308
  %v1313 = vand.u32 2147483647, %v764
  %vm1314 = vcmp.eq.f32.partialorder %v1313, 8.507059e+37
  %v1315 = vand.u32 %v764, 2147483648
  %v1316 = vor.u32 1.1754944e-38, %v1315
  %v1317 = vsel %vm1314, %v1316, %v1312
  %v1318 = vmul.f32 1.0, %v1317
  %v1319 = vrcp.pop %v765
  %v1320 = vmul.f32 %v765, %v1319
  %v1321 = vsub.f32 1.0, %v1320
  %v1322 = vmul.f32 %v1319, %v1321
  %v1323 = vadd.f32 %v1319, %v1322
  %vm1324 = vweird.f32 %v765
  %vm1325 = vweird.f32 %v1319
  %vm1326 = vmor %vm1324, %vm1325
  %v1327 = vsel %vm1326, %v1319, %v1323
  %v1328 = vand.u32 2147483647, %v765
  %vm1329 = vcmp.eq.f32.partialorder %v1328, 8.507059e+37
  %v1330 = vand.u32 %v765, 2147483648
  %v1331 = vor.u32 1.1754944e-38, %v1330
  %v1332 = vsel %vm1329, %v1331, %v1327
  %v1333 = vmul.f32 1.0, %v1332
  %v1334 = vrcp.pop %v766
  %v1335 = vmul.f32 %v766, %v1334
  %v1336 = vsub.f32 1.0, %v1335
  %v1337 = vmul.f32 %v1334, %v1336
  %v1338 = vadd.f32 %v1334, %v1337
  %vm1339 = vweird.f32 %v766
  %vm1340 = vweird.f32 %v1334
  %vm1341 = vmor %vm1339, %vm1340
  %v1342 = vsel %vm1341, %v1334, %v1338
  %v1343 = vand.u32 2147483647, %v766
  %vm1344 = vcmp.eq.f32.partialorder %v1343, 8.507059e+37
  %v1345 = vand.u32 %v766, 2147483648
  %v1346 = vor.u32 1.1754944e-38, %v1345
  %v1347 = vsel %vm1344, %v1346, %v1342
  %v1348 = vmul.f32 1.0, %v1347
  %v1349 = vrcp.pop %v767
  %v1350 = vmul.f32 %v767, %v1349
  %v1351 = vsub.f32 1.0, %v1350
  %v1352 = vmul.f32 %v1349, %v1351
  %v1353 = vadd.f32 %v1349, %v1352
  %vm1354 = vweird.f32 %v767
  %vm1355 = vweird.f32 %v1349
  %vm1356 = vmor %vm1354, %vm1355
  %v1357 = vsel %vm1356, %v1349, %v1353
  %v1358 = vand.u32 2147483647, %v767
  %vm1359 = vcmp.eq.f32.partialorder %v1358, 8.507059e+37
  %v1360 = vand.u32 %v767, 2147483648
  %v1361 = vor.u32 1.1754944e-38, %v1360
  %v1362 = vsel %vm1359, %v1361, %v1357
  %v1363 = vmul.f32 1.0, %v1362
  %v1364 = vrcp.pop %v768
  %v1365 = vmul.f32 %v768, %v1364
  %v1366 = vsub.f32 1.0, %v1365
  %v1367 = vmul.f32 %v1364, %v1366
  %v1368 = vadd.f32 %v1364, %v1367
  %vm1369 = vweird.f32 %v768
  %vm1370 = vweird.f32 %v1364
  %vm1371 = vmor %vm1369, %vm1370
  %v1372 = vsel %vm1371, %v1364, %v1368
  %v1373 = vand.u32 2147483647, %v768
  %vm1374 = vcmp.eq.f32.partialorder %v1373, 8.507059e+37
  %v1375 = vand.u32 %v768, 2147483648
  %v1376 = vor.u32 1.1754944e-38, %v1375
  %v1377 = vsel %vm1374, %v1376, %v1372
  %v1378 = vmul.f32 1.0, %v1377
  %v1379 = vrcp.pop %v769
  %v1380 = vmul.f32 %v769, %v1379
  %v1381 = vsub.f32 1.0, %v1380
  %v1382 = vmul.f32 %v1379, %v1381
  %v1383 = vadd.f32 %v1379, %v1382
  %vm1384 = vweird.f32 %v769
  %vm1385 = vweird.f32 %v1379
  %vm1386 = vmor %vm1384, %vm1385
  %v1387 = vsel %vm1386, %v1379, %v1383
  %v1388 = vand.u32 2147483647, %v769
  %vm1389 = vcmp.eq.f32.partialorder %v1388, 8.507059e+37
  %v1390 = vand.u32 %v769, 2147483648
  %v1391 = vor.u32 1.1754944e-38, %v1390
  %v1392 = vsel %vm1389, %v1391, %v1387
  %v1393 = vmul.f32 1.0, %v1392
  %v1394 = vrcp.pop %v770
  %v1395 = vmul.f32 %v770, %v1394
  %v1396 = vsub.f32 1.0, %v1395
  %v1397 = vmul.f32 %v1394, %v1396
  %v1398 = vadd.f32 %v1394, %v1397
  %vm1399 = vweird.f32 %v770
  %vm1400 = vweird.f32 %v1394
  %vm1401 = vmor %vm1399, %vm1400
  %v1402 = vsel %vm1401, %v1394, %v1398
  %v1403 = vand.u32 2147483647, %v770
  %vm1404 = vcmp.eq.f32.partialorder %v1403, 8.507059e+37
  %v1405 = vand.u32 %v770, 2147483648
  %v1406 = vor.u32 1.1754944e-38, %v1405
  %v1407 = vsel %vm1404, %v1406, %v1402
  %v1408 = vmul.f32 1.0, %v1407
  %v1409 = vrcp.pop %v771
  %v1410 = vmul.f32 %v771, %v1409
  %v1411 = vsub.f32 1.0, %v1410
  %v1412 = vmul.f32 %v1409, %v1411
  %v1413 = vadd.f32 %v1409, %v1412
  %vm1414 = vweird.f32 %v771
  %vm1415 = vweird.f32 %v1409
  %vm1416 = vmor %vm1414, %vm1415
  %v1417 = vsel %vm1416, %v1409, %v1413
  %v1418 = vand.u32 2147483647, %v771
  %vm1419 = vcmp.eq.f32.partialorder %v1418, 8.507059e+37
  %v1420 = vand.u32 %v771, 2147483648
  %v1421 = vor.u32 1.1754944e-38, %v1420
  %v1422 = vsel %vm1419, %v1421, %v1417
  %v1423 = vmul.f32 1.0, %v1422
  %v1424 = vrcp.pop %v772
  %v1425 = vmul.f32 %v772, %v1424
  %v1426 = vsub.f32 1.0, %v1425
  %v1427 = vmul.f32 %v1424, %v1426
  %v1428 = vadd.f32 %v1424, %v1427
  %vm1429 = vweird.f32 %v772
  %vm1430 = vweird.f32 %v1424
  %vm1431 = vmor %vm1429, %vm1430
  %v1432 = vsel %vm1431, %v1424, %v1428
  %v1433 = vand.u32 2147483647, %v772
  %vm1434 = vcmp.eq.f32.partialorder %v1433, 8.507059e+37
  %v1435 = vand.u32 %v772, 2147483648
  %v1436 = vor.u32 1.1754944e-38, %v1435
  %v1437 = vsel %vm1434, %v1436, %v1432
  %v1438 = vmul.f32 1.0, %v1437
  %v1439 = vrcp.pop %v773
  %v1440 = vmul.f32 %v773, %v1439
  %v1441 = vsub.f32 1.0, %v1440
  %v1442 = vmul.f32 %v1439, %v1441
  %v1443 = vadd.f32 %v1439, %v1442
  %vm1444 = vweird.f32 %v773
  %vm1445 = vweird.f32 %v1439
  %vm1446 = vmor %vm1444, %vm1445
  %v1447 = vsel %vm1446, %v1439, %v1443
  %v1448 = vand.u32 2147483647, %v773
  %vm1449 = vcmp.eq.f32.partialorder %v1448, 8.507059e+37
  %v1450 = vand.u32 %v773, 2147483648
  %v1451 = vor.u32 1.1754944e-38, %v1450
  %v1452 = vsel %vm1449, %v1451, %v1447
  %v1453 = vmul.f32 1.0, %v1452
  %v1454 = vrcp.pop %v774
  %v1455 = vmul.f32 %v774, %v1454
  %v1456 = vsub.f32 1.0, %v1455
  %v1457 = vmul.f32 %v1454, %v1456
  %v1458 = vadd.f32 %v1454, %v1457
  %vm1459 = vweird.f32 %v774
  %vm1460 = vweird.f32 %v1454
  %vm1461 = vmor %vm1459, %vm1460
  %v1462 = vsel %vm1461, %v1454, %v1458
  %v1463 = vand.u32 2147483647, %v774
  %vm1464 = vcmp.eq.f32.partialorder %v1463, 8.507059e+37
  %v1465 = vand.u32 %v774, 2147483648
  %v1466 = vor.u32 1.1754944e-38, %v1465
  %v1467 = vsel %vm1464, %v1466, %v1462
  %v1468 = vmul.f32 1.0, %v1467
  %v1469 = vrcp.pop %v775
  %v1470 = vmul.f32 %v775, %v1469
  %v1471 = vsub.f32 1.0, %v1470
  %v1472 = vmul.f32 %v1469, %v1471
  %v1473 = vadd.f32 %v1469, %v1472
  %vm1474 = vweird.f32 %v775
  %vm1475 = vweird.f32 %v1469
  %vm1476 = vmor %vm1474, %vm1475
  %v1477 = vsel %vm1476, %v1469, %v1473
  %v1478 = vand.u32 2147483647, %v775
  %vm1479 = vcmp.eq.f32.partialorder %v1478, 8.507059e+37
  %v1480 = vand.u32 %v775, 2147483648
  %v1481 = vor.u32 1.1754944e-38, %v1480
  %v1482 = vsel %vm1479, %v1481, %v1477
  %v1483 = vmul.f32 1.0, %v1482
  %v1484 = vrcp.pop %v776
  %v1485 = vmul.f32 %v776, %v1484
  %v1486 = vsub.f32 1.0, %v1485
  %v1487 = vmul.f32 %v1484, %v1486
  %v1488 = vadd.f32 %v1484, %v1487
  %vm1489 = vweird.f32 %v776
  %vm1490 = vweird.f32 %v1484
  %vm1491 = vmor %vm1489, %vm1490
  %v1492 = vsel %vm1491, %v1484, %v1488
  %v1493 = vand.u32 2147483647, %v776
  %vm1494 = vcmp.eq.f32.partialorder %v1493, 8.507059e+37
  %v1495 = vand.u32 %v776, 2147483648
  %v1496 = vor.u32 1.1754944e-38, %v1495
  %v1497 = vsel %vm1494, %v1496, %v1492
  %v1498 = vmul.f32 1.0, %v1497
  %v1499 = vrcp.pop %v777
  %v1500 = vmul.f32 %v777, %v1499
  %v1501 = vsub.f32 1.0, %v1500
  %v1502 = vmul.f32 %v1499, %v1501
  %v1503 = vadd.f32 %v1499, %v1502
  %vm1504 = vweird.f32 %v777
  %vm1505 = vweird.f32 %v1499
  %vm1506 = vmor %vm1504, %vm1505
  %v1507 = vsel %vm1506, %v1499, %v1503
  %v1508 = vand.u32 2147483647, %v777
  %vm1509 = vcmp.eq.f32.partialorder %v1508, 8.507059e+37
  %v1510 = vand.u32 %v777, 2147483648
  %v1511 = vor.u32 1.1754944e-38, %v1510
  %v1512 = vsel %vm1509, %v1511, %v1507
  %v1513 = vmul.f32 1.0, %v1512
  %v1514 = vrcp.pop %v778
  %v1515 = vmul.f32 %v778, %v1514
  %v1516 = vsub.f32 1.0, %v1515
  %v1517 = vmul.f32 %v1514, %v1516
  %v1518 = vadd.f32 %v1514, %v1517
  %vm1519 = vweird.f32 %v778
  %vm1520 = vweird.f32 %v1514
  %vm1521 = vmor %vm1519, %vm1520
  %v1522 = vsel %vm1521, %v1514, %v1518
  %v1523 = vand.u32 2147483647, %v778
  %vm1524 = vcmp.eq.f32.partialorder %v1523, 8.507059e+37
  %v1525 = vand.u32 %v778, 2147483648
  %v1526 = vor.u32 1.1754944e-38, %v1525
  %v1527 = vsel %vm1524, %v1526, %v1522
  %v1528 = vmul.f32 1.0, %v1527
  %v1529 = vrcp.pop %v779
  %v1530 = vmul.f32 %v779, %v1529
  %v1531 = vsub.f32 1.0, %v1530
  %v1532 = vmul.f32 %v1529, %v1531
  %v1533 = vadd.f32 %v1529, %v1532
  %vm1534 = vweird.f32 %v779
  %vm1535 = vweird.f32 %v1529
  %vm1536 = vmor %vm1534, %vm1535
  %v1537 = vsel %vm1536, %v1529, %v1533
  %v1538 = vand.u32 2147483647, %v779
  %vm1539 = vcmp.eq.f32.partialorder %v1538, 8.507059e+37
  %v1540 = vand.u32 %v779, 2147483648
  %v1541 = vor.u32 1.1754944e-38, %v1540
  %v1542 = vsel %vm1539, %v1541, %v1537
  %v1543 = vmul.f32 1.0, %v1542
  %v1544 = vrcp.pop %v780
  %v1545 = vmul.f32 %v780, %v1544
  %v1546 = vsub.f32 1.0, %v1545
  %v1547 = vmul.f32 %v1544, %v1546
  %v1548 = vadd.f32 %v1544, %v1547
  %vm1549 = vweird.f32 %v780
  %vm1550 = vweird.f32 %v1544
  %vm1551 = vmor %vm1549, %vm1550
  %v1552 = vsel %vm1551, %v1544, %v1548
  %v1553 = vand.u32 2147483647, %v780
  %vm1554 = vcmp.eq.f32.partialorder %v1553, 8.507059e+37
  %v1555 = vand.u32 %v780, 2147483648
  %v1556 = vor.u32 1.1754944e-38, %v1555
  %v1557 = vsel %vm1554, %v1556, %v1552
  %v1558 = vmul.f32 1.0, %v1557
  %v1559 = vrcp.pop %v781
  %v1560 = vmul.f32 %v781, %v1559
  %v1561 = vsub.f32 1.0, %v1560
  %v1562 = vmul.f32 %v1559, %v1561
  %v1563 = vadd.f32 %v1559, %v1562
  %vm1564 = vweird.f32 %v781
  %vm1565 = vweird.f32 %v1559
  %vm1566 = vmor %vm1564, %vm1565
  %v1567 = vsel %vm1566, %v1559, %v1563
  %v1568 = vand.u32 2147483647, %v781
  %vm1569 = vcmp.eq.f32.partialorder %v1568, 8.507059e+37
  %v1570 = vand.u32 %v781, 2147483648
  %v1571 = vor.u32 1.1754944e-38, %v1570
  %v1572 = vsel %vm1569, %v1571, %v1567
  %v1573 = vmul.f32 1.0, %v1572
  %v1574 = vrcp.pop %v782
  %v1575 = vmul.f32 %v782, %v1574
  %v1576 = vsub.f32 1.0, %v1575
  %v1577 = vmul.f32 %v1574, %v1576
  %v1578 = vadd.f32 %v1574, %v1577
  %vm1579 = vweird.f32 %v782
  %vm1580 = vweird.f32 %v1574
  %vm1581 = vmor %vm1579, %vm1580
  %v1582 = vsel %vm1581, %v1574, %v1578
  %v1583 = vand.u32 2147483647, %v782
  %vm1584 = vcmp.eq.f32.partialorder %v1583, 8.507059e+37
  %v1585 = vand.u32 %v782, 2147483648
  %v1586 = vor.u32 1.1754944e-38, %v1585
  %v1587 = vsel %vm1584, %v1586, %v1582
  %v1588 = vmul.f32 1.0, %v1587
  %v1589 = vrcp.pop %v783
  %v1590 = vmul.f32 %v783, %v1589
  %v1591 = vsub.f32 1.0, %v1590
  %v1592 = vmul.f32 %v1589, %v1591
  %v1593 = vadd.f32 %v1589, %v1592
  %vm1594 = vweird.f32 %v783
  %vm1595 = vweird.f32 %v1589
  %vm1596 = vmor %vm1594, %vm1595
  %v1597 = vsel %vm1596, %v1589, %v1593
  %v1598 = vand.u32 2147483647, %v783
  %vm1599 = vcmp.eq.f32.partialorder %v1598, 8.507059e+37
  %v1600 = vand.u32 %v783, 2147483648
  %v1601 = vor.u32 1.1754944e-38, %v1600
  %v1602 = vsel %vm1599, %v1601, %v1597
  %v1603 = vmul.f32 1.0, %v1602
  %v1604 = vrcp.pop %v784
  %v1605 = vmul.f32 %v784, %v1604
  %v1606 = vsub.f32 1.0, %v1605
  %v1607 = vmul.f32 %v1604, %v1606
  %v1608 = vadd.f32 %v1604, %v1607
  %vm1609 = vweird.f32 %v784
  %vm1610 = vweird.f32 %v1604
  %vm1611 = vmor %vm1609, %vm1610
  %v1612 = vsel %vm1611, %v1604, %v1608
  %v1613 = vand.u32 2147483647, %v784
  %vm1614 = vcmp.eq.f32.partialorder %v1613, 8.507059e+37
  %v1615 = vand.u32 %v784, 2147483648
  %v1616 = vor.u32 1.1754944e-38, %v1615
  %v1617 = vsel %vm1614, %v1616, %v1612
  %v1618 = vmul.f32 1.0, %v1617
  %v1619 = vrcp.pop %v785
  %v1620 = vmul.f32 %v785, %v1619
  %v1621 = vsub.f32 1.0, %v1620
  %v1622 = vmul.f32 %v1619, %v1621
  %v1623 = vadd.f32 %v1619, %v1622
  %vm1624 = vweird.f32 %v785
  %vm1625 = vweird.f32 %v1619
  %vm1626 = vmor %vm1624, %vm1625
  %v1627 = vsel %vm1626, %v1619, %v1623
  %v1628 = vand.u32 2147483647, %v785
  %vm1629 = vcmp.eq.f32.partialorder %v1628, 8.507059e+37
  %v1630 = vand.u32 %v785, 2147483648
  %v1631 = vor.u32 1.1754944e-38, %v1630
  %v1632 = vsel %vm1629, %v1631, %v1627
  %v1633 = vmul.f32 1.0, %v1632
  %v1634 = vrcp.pop %v786
  %v1635 = vmul.f32 %v786, %v1634
  %v1636 = vsub.f32 1.0, %v1635
  %v1637 = vmul.f32 %v1634, %v1636
  %v1638 = vadd.f32 %v1634, %v1637
  %vm1639 = vweird.f32 %v786
  %vm1640 = vweird.f32 %v1634
  %vm1641 = vmor %vm1639, %vm1640
  %v1642 = vsel %vm1641, %v1634, %v1638
  %v1643 = vand.u32 2147483647, %v786
  %vm1644 = vcmp.eq.f32.partialorder %v1643, 8.507059e+37
  %v1645 = vand.u32 %v786, 2147483648
  %v1646 = vor.u32 1.1754944e-38, %v1645
  %v1647 = vsel %vm1644, %v1646, %v1642
  %v1648 = vmul.f32 1.0, %v1647
  %v1649 = vrcp.pop %v787
  %v1650 = vmul.f32 %v787, %v1649
  %v1651 = vsub.f32 1.0, %v1650
  %v1652 = vmul.f32 %v1649, %v1651
  %v1653 = vadd.f32 %v1649, %v1652
  %vm1654 = vweird.f32 %v787
  %vm1655 = vweird.f32 %v1649
  %vm1656 = vmor %vm1654, %vm1655
  %v1657 = vsel %vm1656, %v1649, %v1653
  %v1658 = vand.u32 2147483647, %v787
  %vm1659 = vcmp.eq.f32.partialorder %v1658, 8.507059e+37
  %v1660 = vand.u32 %v787, 2147483648
  %v1661 = vor.u32 1.1754944e-38, %v1660
  %v1662 = vsel %vm1659, %v1661, %v1657
  %v1663 = vmul.f32 1.0, %v1662
  %v1664 = vrcp.pop %v788
  %v1665 = vmul.f32 %v788, %v1664
  %v1666 = vsub.f32 1.0, %v1665
  %v1667 = vmul.f32 %v1664, %v1666
  %v1668 = vadd.f32 %v1664, %v1667
  %vm1669 = vweird.f32 %v788
  %vm1670 = vweird.f32 %v1664
  %vm1671 = vmor %vm1669, %vm1670
  %v1672 = vsel %vm1671, %v1664, %v1668
  %v1673 = vand.u32 2147483647, %v788
  %vm1674 = vcmp.eq.f32.partialorder %v1673, 8.507059e+37
  %v1675 = vand.u32 %v788, 2147483648
  %v1676 = vor.u32 1.1754944e-38, %v1675
  %v1677 = vsel %vm1674, %v1676, %v1672
  %v1678 = vmul.f32 1.0, %v1677
  %v1679 = vrcp.pop %v789
  %v1680 = vmul.f32 %v789, %v1679
  %v1681 = vsub.f32 1.0, %v1680
  %v1682 = vmul.f32 %v1679, %v1681
  %v1683 = vadd.f32 %v1679, %v1682
  %vm1684 = vweird.f32 %v789
  %vm1685 = vweird.f32 %v1679
  %vm1686 = vmor %vm1684, %vm1685
  %v1687 = vsel %vm1686, %v1679, %v1683
  %v1688 = vand.u32 2147483647, %v789
  %vm1689 = vcmp.eq.f32.partialorder %v1688, 8.507059e+37
  %v1690 = vand.u32 %v789, 2147483648
  %v1691 = vor.u32 1.1754944e-38, %v1690
  %v1692 = vsel %vm1689, %v1691, %v1687
  %v1693 = vmul.f32 1.0, %v1692
  %v1694 = vrcp.pop %v790
  %v1695 = vmul.f32 %v790, %v1694
  %v1696 = vsub.f32 1.0, %v1695
  %v1697 = vmul.f32 %v1694, %v1696
  %v1698 = vadd.f32 %v1694, %v1697
  %vm1699 = vweird.f32 %v790
  %vm1700 = vweird.f32 %v1694
  %vm1701 = vmor %vm1699, %vm1700
  %v1702 = vsel %vm1701, %v1694, %v1698
  %v1703 = vand.u32 2147483647, %v790
  %vm1704 = vcmp.eq.f32.partialorder %v1703, 8.507059e+37
  %v1705 = vand.u32 %v790, 2147483648
  %v1706 = vor.u32 1.1754944e-38, %v1705
  %v1707 = vsel %vm1704, %v1706, %v1702
  %v1708 = vmul.f32 1.0, %v1707
  %v1709 = vrcp.pop %v791
  %v1710 = vmul.f32 %v791, %v1709
  %v1711 = vsub.f32 1.0, %v1710
  %v1712 = vmul.f32 %v1709, %v1711
  %v1713 = vadd.f32 %v1709, %v1712
  %vm1714 = vweird.f32 %v791
  %vm1715 = vweird.f32 %v1709
  %vm1716 = vmor %vm1714, %vm1715
  %v1717 = vsel %vm1716, %v1709, %v1713
  %v1718 = vand.u32 2147483647, %v791
  %vm1719 = vcmp.eq.f32.partialorder %v1718, 8.507059e+37
  %v1720 = vand.u32 %v791, 2147483648
  %v1721 = vor.u32 1.1754944e-38, %v1720
  %v1722 = vsel %vm1719, %v1721, %v1717
  %v1723 = vmul.f32 1.0, %v1722
  %v1724 = vrcp.pop %v792
  %v1725 = vmul.f32 %v792, %v1724
  %v1726 = vsub.f32 1.0, %v1725
  %v1727 = vmul.f32 %v1724, %v1726
  %v1728 = vadd.f32 %v1724, %v1727
  %vm1729 = vweird.f32 %v792
  %vm1730 = vweird.f32 %v1724
  %vm1731 = vmor %vm1729, %vm1730
  %v1732 = vsel %vm1731, %v1724, %v1728
  %v1733 = vand.u32 2147483647, %v792
  %vm1734 = vcmp.eq.f32.partialorder %v1733, 8.507059e+37
  %v1735 = vand.u32 %v792, 2147483648
  %v1736 = vor.u32 1.1754944e-38, %v1735
  %v1737 = vsel %vm1734, %v1736, %v1732
  %v1738 = vmul.f32 1.0, %v1737
  %v1739 = vrcp.pop %v793
  %v1740 = vmul.f32 %v793, %v1739
  %v1741 = vsub.f32 1.0, %v1740
  %v1742 = vmul.f32 %v1739, %v1741
  %v1743 = vadd.f32 %v1739, %v1742
  %vm1744 = vweird.f32 %v793
  %vm1745 = vweird.f32 %v1739
  %vm1746 = vmor %vm1744, %vm1745
  %v1747 = vsel %vm1746, %v1739, %v1743
  %v1748 = vand.u32 2147483647, %v793
  %vm1749 = vcmp.eq.f32.partialorder %v1748, 8.507059e+37
  %v1750 = vand.u32 %v793, 2147483648
  %v1751 = vor.u32 1.1754944e-38, %v1750
  %v1752 = vsel %vm1749, %v1751, %v1747
  %v1753 = vmul.f32 1.0, %v1752
  %v1754 = vmul.f32 %v474, %v808
  %v1755 = vmul.f32 %v475, %v823
  %v1756 = vmul.f32 %v476, %v838
  %v1757 = vmul.f32 %v477, %v853
  %v1758 = vmul.f32 %v478, %v868
  %v1759 = vmul.f32 %v479, %v883
  %v1760 = vmul.f32 %v480, %v898
  %v1761 = vmul.f32 %v481, %v913
  %v1762 = vmul.f32 %v482, %v928
  %v1763 = vmul.f32 %v483, %v943
  %v1764 = vmul.f32 %v484, %v958
  %v1765 = vmul.f32 %v485, %v973
  %v1766 = vmul.f32 %v486, %v988
  %v1767 = vmul.f32 %v487, %v1003
  %v1768 = vmul.f32 %v488, %v1018
  %v1769 = vmul.f32 %v489, %v1033
  %v1770 = vmul.f32 %v490, %v1048
  %v1771 = vmul.f32 %v491, %v1063
  %v1772 = vmul.f32 %v492, %v1078
  %v1773 = vmul.f32 %v493, %v1093
  %v1774 = vmul.f32 %v494, %v1108
  %v1775 = vmul.f32 %v495, %v1123
  %v1776 = vmul.f32 %v496, %v1138
  %v1777 = vmul.f32 %v497, %v1153
  %v1778 = vmul.f32 %v498, %v1168
  %v1779 = vmul.f32 %v499, %v1183
  %v1780 = vmul.f32 %v500, %v1198
  %v1781 = vmul.f32 %v501, %v1213
  %v1782 = vmul.f32 %v502, %v1228
  %v1783 = vmul.f32 %v503, %v1243
  %v1784 = vmul.f32 %v504, %v1258
  %v1785 = vmul.f32 %v505, %v1273
  %v1786 = vmul.f32 %v506, %v1288
  %v1787 = vmul.f32 %v507, %v1303
  %v1788 = vmul.f32 %v508, %v1318
  %v1789 = vmul.f32 %v509, %v1333
  %v1790 = vmul.f32 %v510, %v1348
  %v1791 = vmul.f32 %v511, %v1363
  %v1792 = vmul.f32 %v512, %v1378
  %v1793 = vmul.f32 %v513, %v1393
  %v1794 = vmul.f32 %v514, %v1408
  %v1795 = vmul.f32 %v515, %v1423
  %v1796 = vmul.f32 %v516, %v1438
  %v1797 = vmul.f32 %v517, %v1453
  %v1798 = vmul.f32 %v518, %v1468
  %v1799 = vmul.f32 %v519, %v1483
  %v1800 = vmul.f32 %v520, %v1498
  %v1801 = vmul.f32 %v521, %v1513
  %v1802 = vmul.f32 %v522, %v1528
  %v1803 = vmul.f32 %v523, %v1543
  %v1804 = vmul.f32 %v524, %v1558
  %v1805 = vmul.f32 %v525, %v1573
  %v1806 = vmul.f32 %v526, %v1588
  %v1807 = vmul.f32 %v527, %v1603
  %v1808 = vmul.f32 %v528, %v1618
  %v1809 = vmul.f32 %v529, %v1633
  %v1810 = vmul.f32 %v530, %v1648
  %v1811 = vmul.f32 %v531, %v1663
  %v1812 = vmul.f32 %v532, %v1678
  %v1813 = vmul.f32 %v533, %v1693
  %v1814 = vmul.f32 %v534, %v1708
  %v1815 = vmul.f32 %v535, %v1723
  %v1816 = vmul.f32 %v536, %v1738
  %v1817 = vmul.f32 %v537, %v1753
  %vm1818 = vcmask 261120
  %1819 = vst.msk [vmem:[%s4] sm:$0xff] %vm1818, %v1754
  %1820 = vst.msk [vmem:[%s4 + $0x8] sm:$0xff] %vm1818, %v1755
  %1821 = vst.msk [vmem:[%s4 + $0x10] sm:$0xff] %vm1818, %v1756
  %1822 = vst.msk [vmem:[%s4 + $0x18] sm:$0xff] %vm1818, %v1757
  %1823 = vst.msk [vmem:[%s4 + $0x20] sm:$0xff] %vm1818, %v1758
  %1824 = vst.msk [vmem:[%s4 + $0x28] sm:$0xff] %vm1818, %v1759
  %1825 = vst.msk [vmem:[%s4 + $0x30] sm:$0xff] %vm1818, %v1760
  %1826 = vst.msk [vmem:[%s4 + $0x38] sm:$0xff] %vm1818, %v1761
  %1827 = vst.msk [vmem:[%s4 + $0x40] sm:$0xff] %vm1818, %v1762
  %1828 = vst.msk [vmem:[%s4 + $0x48] sm:$0xff] %vm1818, %v1763
  %1829 = vst.msk [vmem:[%s4 + $0x50] sm:$0xff] %vm1818, %v1764
  %1830 = vst.msk [vmem:[%s4 + $0x58] sm:$0xff] %vm1818, %v1765
  %1831 = vst.msk [vmem:[%s4 + $0x60] sm:$0xff] %vm1818, %v1766
  %1832 = vst.msk [vmem:[%s4 + $0x68] sm:$0xff] %vm1818, %v1767
  %1833 = vst.msk [vmem:[%s4 + $0x70] sm:$0xff] %vm1818, %v1768
  %1834 = vst.msk [vmem:[%s4 + $0x78] sm:$0xff] %vm1818, %v1769
  %1835 = vst.msk [vmem:[%s4 + $0x80] sm:$0xff] %vm1818, %v1770
  %1836 = vst.msk [vmem:[%s4 + $0x88] sm:$0xff] %vm1818, %v1771
  %1837 = vst.msk [vmem:[%s4 + $0x90] sm:$0xff] %vm1818, %v1772
  %1838 = vst.msk [vmem:[%s4 + $0x98] sm:$0xff] %vm1818, %v1773
  %1839 = vst.msk [vmem:[%s4 + $0xa0] sm:$0xff] %vm1818, %v1774
  %1840 = vst.msk [vmem:[%s4 + $0xa8] sm:$0xff] %vm1818, %v1775
  %1841 = vst.msk [vmem:[%s4 + $0xb0] sm:$0xff] %vm1818, %v1776
  %1842 = vst.msk [vmem:[%s4 + $0xb8] sm:$0xff] %vm1818, %v1777
  %1843 = vst.msk [vmem:[%s4 + $0xc0] sm:$0xff] %vm1818, %v1778
  %1844 = vst.msk [vmem:[%s4 + $0xc8] sm:$0xff] %vm1818, %v1779
  %1845 = vst.msk [vmem:[%s4 + $0xd0] sm:$0xff] %vm1818, %v1780
  %1846 = vst.msk [vmem:[%s4 + $0xd8] sm:$0xff] %vm1818, %v1781
  %1847 = vst.msk [vmem:[%s4 + $0xe0] sm:$0xff] %vm1818, %v1782
  %1848 = vst.msk [vmem:[%s4 + $0xe8] sm:$0xff] %vm1818, %v1783
  %1849 = vst.msk [vmem:[%s4 + $0xf0] sm:$0xff] %vm1818, %v1784
  %1850 = vst.msk [vmem:[%s4 + $0xf8] sm:$0xff] %vm1818, %v1785
  %1851 = vst.msk [vmem:[%s4 + $0x100] sm:$0xff] %vm1818, %v1786
  %1852 = vst.msk [vmem:[%s4 + $0x108] sm:$0xff] %vm1818, %v1787
  %1853 = vst.msk [vmem:[%s4 + $0x110] sm:$0xff] %vm1818, %v1788
  %1854 = vst.msk [vmem:[%s4 + $0x118] sm:$0xff] %vm1818, %v1789
  %1855 = vst.msk [vmem:[%s4 + $0x120] sm:$0xff] %vm1818, %v1790
  %1856 = vst.msk [vmem:[%s4 + $0x128] sm:$0xff] %vm1818, %v1791
  %1857 = vst.msk [vmem:[%s4 + $0x130] sm:$0xff] %vm1818, %v1792
  %1858 = vst.msk [vmem:[%s4 + $0x138] sm:$0xff] %vm1818, %v1793
  %1859 = vst.msk [vmem:[%s4 + $0x140] sm:$0xff] %vm1818, %v1794
  %1860 = vst.msk [vmem:[%s4 + $0x148] sm:$0xff] %vm1818, %v1795
  %1861 = vst.msk [vmem:[%s4 + $0x150] sm:$0xff] %vm1818, %v1796
  %1862 = vst.msk [vmem:[%s4 + $0x158] sm:$0xff] %vm1818, %v1797
  %1863 = vst.msk [vmem:[%s4 + $0x160] sm:$0xff] %vm1818, %v1798
  %1864 = vst.msk [vmem:[%s4 + $0x168] sm:$0xff] %vm1818, %v1799
  %1865 = vst.msk [vmem:[%s4 + $0x170] sm:$0xff] %vm1818, %v1800
  %1866 = vst.msk [vmem:[%s4 + $0x178] sm:$0xff] %vm1818, %v1801
  %1867 = vst.msk [vmem:[%s4 + $0x180] sm:$0xff] %vm1818, %v1802
  %1868 = vst.msk [vmem:[%s4 + $0x188] sm:$0xff] %vm1818, %v1803
  %1869 = vst.msk [vmem:[%s4 + $0x190] sm:$0xff] %vm1818, %v1804
  %1870 = vst.msk [vmem:[%s4 + $0x198] sm:$0xff] %vm1818, %v1805
  %1871 = vst.msk [vmem:[%s4 + $0x1a0] sm:$0xff] %vm1818, %v1806
  %1872 = vst.msk [vmem:[%s4 + $0x1a8] sm:$0xff] %vm1818, %v1807
  %1873 = vst.msk [vmem:[%s4 + $0x1b0] sm:$0xff] %vm1818, %v1808
  %1874 = vst.msk [vmem:[%s4 + $0x1b8] sm:$0xff] %vm1818, %v1809
  %1875 = vst.msk [vmem:[%s4 + $0x1c0] sm:$0xff] %vm1818, %v1810
  %1876 = vst.msk [vmem:[%s4 + $0x1c8] sm:$0xff] %vm1818, %v1811
  %1877 = vst.msk [vmem:[%s4 + $0x1d0] sm:$0xff] %vm1818, %v1812
  %1878 = vst.msk [vmem:[%s4 + $0x1d8] sm:$0xff] %vm1818, %v1813
  %1879 = vst.msk [vmem:[%s4 + $0x1e0] sm:$0xff] %vm1818, %v1814
  %1880 = vst.msk [vmem:[%s4 + $0x1e8] sm:$0xff] %vm1818, %v1815
  %1881 = vst.msk [vmem:[%s4 + $0x1f0] sm:$0xff] %vm1818, %v1816
  %1882 = vst.msk [vmem:[%s4 + $0x1f8] sm:$0xff] %vm1818, %v1817
  // Predicated region
  $region18: #{tpu_custom_call.1} parent=0 // pred_check
    _
  $region19: #{tpu_custom_call.1} parent=0 // pred_check_branch
    %1884 = sbr.rel (0) target = $region21
  $region20: #{tpu_custom_call.1} parent=0 // pred_region
    _
  $region21: #{tpu_custom_call.1} parent=0 // pred_fallthru
    _
  // Predicated region
  $region22: #{tpu_custom_call.1} parent=0 // pred_check
    _
  $region23: #{tpu_custom_call.1} parent=0 // pred_check_branch
    %1886 = sbr.rel (0) target = $region25
  $region24: #{tpu_custom_call.1} parent=0 // pred_region
    _
  $region25: #{tpu_custom_call.1} parent=0 // pred_fallthru
    _

</llo_original>
